<compile_context>
chip_gen: v7x
topology: tpu7x:2x2x1
jax: 0.10.0
libtpu: 0.0.40
codegen_flags: <defaults>
</compile_context>

<pallas_src>
import functools

import jax
import jax.numpy as jnp
from jax import lax
from jax.experimental import pallas as pl
from jax.experimental.pallas import tpu as pltpu


_LANE = 128      # lane width
_SUB = 32        # row quantum: int8 sublane packing (32 rows per int8 vreg)
_P1_ROWS = 8     # phase-1 sub-chunk height (keeps intermediates vreg-resident)


def _fast_recip(x):
    """f32 reciprocal: EUP approximate vrcp + one Newton-Raphson step.

    The NR step is NaN exactly when x == 0 or x == +-inf (x*r -> 0*inf); one
    NaN-guarded select falls back to the raw approximation there so 1/0 stays
    +-inf and 1/inf stays 0 (matching exact division).
    """
    r = pl.reciprocal(x, approx=True)
    r2 = r * (2.0 - x * r)
    return jnp.where(r2 == r2, r2, r)


def _atan_f32(x):
    """Cephes-style float32 arctan: one EUP reciprocal per call.

    Matches jnp.arctan / torch.atan to ~1e-6 for f32; +-inf -> +-pi/2.
    """
    ax = jnp.abs(x)
    big = ax > 2.414213562373095           # tan(3*pi/8)
    mid = ax > 0.4142135623730951          # tan(pi/8); big branch wins below
    # Single reciprocal: denominator is ax (big) or ax+1 (mid); both >= ~1.41,
    # so the only NR failure mode is den == inf, caught by the NaN guard.
    den = jnp.where(big, ax, ax + 1.0)
    inv = pl.reciprocal(den, approx=True)
    inv2 = inv * (2.0 - den * inv)
    inv = jnp.where(inv2 == inv2, inv2, inv)
    xr = jnp.where(big, -inv, jnp.where(mid, (ax - 1.0) * inv, ax))
    y0 = jnp.where(big, jnp.float32(jnp.pi / 2),
                   jnp.where(mid, jnp.float32(jnp.pi / 4), jnp.float32(0.0)))
    z = xr * xr
    poly = ((((8.05374449538e-2 * z - 1.38776856032e-1) * z
              + 1.99777106478e-1) * z - 3.33329491539e-1) * z * xr + xr)
    res = y0 + poly                        # >= 0 (atan of |x|)
    # apply sign of x via sign-bit XOR (atan is odd): no compare/select/mul
    sbit = pltpu.bitcast(x, jnp.uint32) & jnp.uint32(0x80000000)
    return pltpu.bitcast(pltpu.bitcast(res, jnp.uint32) ^ sbit, jnp.float32)


def _sum11(x):
    """Reduce a 2D slab to (1, 1): lane reduce then sublane reduce (XLU)."""
    return jnp.sum(jnp.sum(x, axis=1, keepdims=True), axis=0, keepdims=True)


def _ssi_loss_kernel(p_ref, t_ref, m_ref, loss_ref,
                     a00_ref, a01_ref, a11_ref, b0_ref, b1_ref,
                     scale_ref, shift_ref, s1_ref, s2_ref, s3_ref,
                     prev_t_ref, prev_sp_ref, *, H, W):
    ph = pl.program_id(0)                  # 0: scale/shift sums, 1: loss terms
    i = pl.program_id(1)                   # row-tile index
    last = pl.num_programs(1) - 1
    TH, Wp = p_ref.shape
    w_ragged = (Wp != W)                   # static: need col < W mask?
    n32 = TH // _SUB
    n8 = TH // _P1_ROWS

    # ---- very first step: zero all running sums ----
    @pl.when(jnp.logical_and(ph == 0, i == 0))
    def _():
        z8 = jnp.zeros((8, Wp), jnp.float32)
        a00_ref[...] = z8
        a01_ref[...] = z8
        a11_ref[...] = z8
        b0_ref[...] = z8
        b1_ref[...] = z8
        z1 = jnp.zeros((1, 1), jnp.float32)
        s1_ref[...] = z1
        s2_ref[...] = z1
        s3_ref[...] = z1

    # ---- phase 0: fused masked sums, deferred cross-lane reductions ----
    @pl.when(ph == 0)
    def _():
        def fold32(x):
            # (32, Wp) -> (8, Wp): pure VALU adds of tile-aligned row groups.
            return (x[0:8, :] + x[8:16, :]) + (x[16:24, :] + x[24:32, :])

        def chunk(j, carry):
            a00, a01, a11, b0, b1 = carry
            r = j * _SUB
            if not isinstance(r, int):
                r = pl.multiple_of(r, _SUB)
            m32 = m_ref[pl.ds(r, _SUB), :].astype(jnp.float32)   # int8 -> f32
            p32 = p_ref[pl.ds(r, _SUB), :]
            mp = m32 * p32
            a00 = a00 + fold32(mp * p32)
            a01 = a01 + fold32(mp)
            a11 = a11 + fold32(m32)
            t32 = t_ref[pl.ds(r, _SUB), :]
            b0 = b0 + fold32(mp * t32)
            b1 = b1 + fold32(m32 * t32)
            return a00, a01, a11, b0, b1

        z = jnp.zeros((8, Wp), jnp.float32)
        carry = (z, z, z, z, z)
        if n32 <= 16:
            for j in range(n32):           # fully unrolled (static slices)
                carry = chunk(j, carry)
        else:
            carry = lax.fori_loop(0, n32, chunk, carry)
        a00_ref[...] += carry[0]
        a01_ref[...] += carry[1]
        a11_ref[...] += carry[2]
        b0_ref[...] += carry[3]
        b1_ref[...] += carry[4]

    # ---- end of phase 0: one final collapse + closed-form scale & shift ----
    @pl.when(jnp.logical_and(ph == 0, i == last))
    def _():
        a00 = _sum11(a00_ref[...])
        a01 = _sum11(a01_ref[...])
        a11 = _sum11(a11_ref[...])
        b0 = _sum11(b0_ref[...])
        b1 = _sum11(b1_ref[...])
        det = a00 * a11 - a01 * a01
        valid = det > 0.0
        sdet = jnp.where(valid, det, 1.0)      # exact divide, once per image
        scale_ref[...] = jnp.where(valid, (a11 * b0 - a01 * b1) / sdet, 0.0)
        shift_ref[...] = jnp.where(valid, (-a01 * b0 + a00 * b1) / sdet, 0.0)

    # ---- start of phase 1: clear the row-carry buffers ----
    @pl.when(jnp.logical_and(ph == 1, i == 0))
    def _():
        zrow = jnp.zeros((1, Wp), jnp.float32)
        prev_t_ref[...] = zrow
        prev_sp_ref[...] = zrow

    # ---- phase 1: affine rescale + roll-based gradients, 8-row sub-chunks ----
    @pl.when(ph == 1)
    def _():
        scale = scale_ref[...]                 # (1, 1)
        shift = shift_ref[...]
        # hoisted, loop-invariant masks (no full-tile iotas per iteration)
        col = lax.broadcasted_iota(jnp.int32, (_P1_ROWS, Wp), 1)
        col_g = col >= 1
        if w_ragged:
            col_in = col < W
            col_g = jnp.logical_and(col_g, col_in)
        first_row = lax.broadcasted_iota(jnp.int32, (_P1_ROWS, Wp), 0) == 0
        row_iota = lax.broadcasted_iota(jnp.int32, (_P1_ROWS, 1), 0)
        row0 = i * TH

        def grads(x, prev_row):
            left = pltpu.roll(x, shift=1, axis=1)               # x[r, c-1]
            up = jnp.where(first_row, prev_row,
                           pltpu.roll(x, shift=1, axis=0))      # x[r-1, c]
            dx = x - left
            dy = x - up
            mag = dx * dx + dy * dy
            ang = _atan_f32(dy * _fast_recip(dx + 1e-6))
            return mag, ang

        def chunk(j, carry):
            prev_t, prev_sp, c1, c2, c3 = carry
            r = j * _P1_ROWS
            if not isinstance(r, int):
                r = pl.multiple_of(r, _P1_ROWS)
            p8 = p_ref[pl.ds(r, _P1_ROWS), :]
            t8 = t_ref[pl.ds(r, _P1_ROWS), :]
            sp8 = scale * p8 + shift                            # scaled pred
            rowv = row_iota + (row0 + r)                        # (8, 1) global rows
            row_in = rowv < H
            row_g = jnp.logical_and(rowv >= 1, row_in)
            # l1(sp, t) partial sum over in-image pixels
            d1 = jnp.abs(sp8 - t8)
            if w_ragged:
                d1 = jnp.where(col_in, d1, 0.0)
            c1 = c1 + jnp.where(row_in, d1, 0.0)
            # gradient terms; select (not multiply) so garbage lanes can't leak
            mag_t, ang_t = grads(t8, prev_t)
            mag_p, ang_p = grads(sp8, prev_sp)
            gv = jnp.logical_and(row_g, col_g)                  # (8,1)&(8,Wp)
            c2 = c2 + jnp.where(gv, jnp.abs(mag_p - mag_t), 0.0)
            c3 = c3 + jnp.where(gv, jnp.abs(ang_p - ang_t), 0.0)
            return (t8[_P1_ROWS - 1:_P1_ROWS, :],
                    sp8[_P1_ROWS - 1:_P1_ROWS, :], c1, c2, c3)

        z = jnp.zeros((_P1_ROWS, Wp), jnp.float32)
        carry = (prev_t_ref[...], prev_sp_ref[...], z, z, z)
        if n8 <= 16:
            for j in range(n8):               # fully unrolled (static slices)
                carry = chunk(j, carry)
        else:
            carry = lax.fori_loop(0, n8, chunk, carry)
        # carry this tile's last row for the next tile's boundary dy
        prev_t_ref[...] = carry[0]
        prev_sp_ref[...] = carry[1]
        s1_ref[...] += _sum11(carry[2])
        s2_ref[...] += _sum11(carry[3])
        s3_ref[...] += _sum11(carry[4])

    # ---- end of phase 1: combine the three means into the scalar loss ----
    @pl.when(jnp.logical_and(ph == 1, i == last))
    def _():
        inv_n = jnp.float32(1.0 / (H * W))
        inv_g = jnp.float32(1.0 / ((H - 1) * (W - 1)))
        loss_ref[...] = s1_ref[...] * inv_n + (s2_ref[...] + s3_ref[...]) * inv_g


def scale_and_shift_invariant_gradient_loss(prediction, target, mask, *,
                                            tile_rows=None):
    """Forward pass of ScaleAndShiftInvariantGradientLoss.

    prediction, target: (1, 1, H, W) float (NCHW, like the PyTorch module)
    mask:               (1, 1, H, W) bool
    returns:            scalar float32 loss
    """
    assert prediction.shape[-2:] == target.shape[-2:], \
        "shapes must match (interpolate branch not implemented)"
    H, W = int(target.shape[-2]), int(target.shape[-1])
    assert H >= 2 and W >= 2, "need at least a 2x2 image for the gradient terms"
    lead = 1
    for d in prediction.shape[:-2]:
        lead *= int(d)
    assert lead == 1, "squeeze()/unsqueeze(0) in the reference implies one (H, W) image"

    # explicit reshape (not squeeze) so degenerate dims can never be dropped
    p = prediction.reshape(H, W).astype(jnp.float32)
    t = target.reshape(H, W).astype(jnp.float32)
    m = mask.reshape(H, W).astype(jnp.int8)     # bool mask travels as int8

    Wp = -(-W // _LANE) * _LANE

    # Generation-aware tile budget.  Pipeline live bytes/pixel = 18 B
    # (double-buffered f32 p + f32 t + int8 mask); target ~4-4.5 MiB per f32
    # input block (>=85% of HBM roofline) while keeping the whole pipeline
    # comfortably inside v7x's 64 MiB physical VMEM.
    try:
        vmem_cap = int(pltpu.get_tpu_info().vmem_capacity_bytes)
    except Exception:
        vmem_cap = 64 << 20                     # v7x per-core physical (worst case)
    pipe_budget = min(vmem_cap // 3, 20 << 20)
    if tile_rows is None:
        tile_rows = pipe_budget // (18 * Wp)
    TH = max(_SUB, (int(tile_rows) // _SUB) * _SUB)
    TH = min(TH, -(-H // _SUB) * _SUB)
    Hp = -(-H // TH) * TH
    nt = Hp // TH

    if (Hp, Wp) != (H, W):
        p = jnp.pad(p, ((0, Hp - H), (0, Wp - W)))
        t = jnp.pad(t, ((0, Hp - H), (0, Wp - W)))
        m = jnp.pad(m, ((0, Hp - H), (0, Wp - W)))

    # Explicit scoped-VMEM limit: large tiles exceed v5e's 16 MiB default;
    # 32 MiB (+ actual pipeline bytes) stays below every generation's physical VMEM.
    vmem_limit = int(min(vmem_cap, max(18 * TH * Wp + (8 << 20), 32 << 20)))

    tile = lambda ph, i: (i, 0)
    # mask is only consumed in phase 0; pin its block during phase 1 so the
    # pipeline does not re-stream it from HBM.
    mask_tile = lambda ph, i: (i * (1 - ph), 0)

    out = pl.pallas_call(
        functools.partial(_ssi_loss_kernel, H=H, W=W),
        out_shape=jax.ShapeDtypeStruct((1, 1), jnp.float32),
        grid_spec=pltpu.PrefetchScalarGridSpec(
            num_scalar_prefetch=0,
            grid=(2, nt),                       # (phase, row-tile)
            in_specs=[
                pl.BlockSpec((TH, Wp), tile),       # prediction (f32)
                pl.BlockSpec((TH, Wp), tile),       # target     (f32)
                pl.BlockSpec((TH, Wp), mask_tile),  # mask       (int8)
            ],
            out_specs=pl.BlockSpec((1, 1), lambda ph, i: (0, 0)),
            scratch_shapes=(
                [pltpu.VMEM((8, Wp), jnp.float32)] * 5    # a00,a01,a11,b0,b1
                + [pltpu.VMEM((1, 1), jnp.float32)] * 5   # scale,shift,s1,s2,s3
                + [pltpu.VMEM((1, Wp), jnp.float32)] * 2  # prev_t, prev_sp rows
            ),
        ),
        compiler_params=pltpu.CompilerParams(
            # both axes carry sequential state (running sums, row carry)
            dimension_semantics=("arbitrary", "arbitrary"),
            vmem_limit_bytes=vmem_limit,
        ),
    )(p, t, m)
    return out[0, 0]


def _reference_loss(prediction, target, mask):
    """Pure-JAX reference mirroring the PyTorch module (sanity check)."""
    H, W = target.shape[-2], target.shape[-1]
    p = prediction.reshape(1, H, W).astype(jnp.float32)
    t = target.reshape(1, H, W).astype(jnp.float32)
    m = mask.reshape(1, H, W).astype(jnp.float32)
    a_00 = jnp.sum(m * p * p, (1, 2))
    a_01 = jnp.sum(m * p, (1, 2))
    a_11 = jnp.sum(m, (1, 2))
    b_0 = jnp.sum(m * p * t, (1, 2))
    b_1 = jnp.sum(m * t, (1, 2))
    det = a_00 * a_11 - a_01 * a_01
    valid = det > 0
    sdet = jnp.where(valid, det, 1.0)
    x_0 = jnp.where(valid, (a_11 * b_0 - a_01 * b_1) / sdet, 0.0)
    x_1 = jnp.where(valid, (-a_01 * b_0 + a_00 * b_1) / sdet, 0.0)
    sp = x_0.reshape(-1, 1, 1) * p + x_1.reshape(-1, 1, 1)

    def g(x):
        dx = x[..., 1:, 1:] - x[..., 1:, :-1]
        dy = x[..., 1:, 1:] - x[..., :-1, 1:]
        return dx * dx + dy * dy, jnp.arctan(dy / (dx + 1e-6))

    mag_t, ang_t = g(t)
    mag_p, ang_p = g(sp)
    loss = jnp.mean(jnp.abs(sp - t))
    loss = loss + jnp.mean(jnp.abs(mag_p - mag_t))
    loss = loss + jnp.mean(jnp.abs(ang_p - ang_t))
    return loss


if __name__ == "__main__":
    key = jax.random.PRNGKey(0)
    k1, k2, k3, k4, k5, k6 = jax.random.split(key, 6)

    # --- case 1: small single-tile image (module-style NCHW inputs) ---
    H, W = 16, 16
    prediction = jax.random.uniform(k1, (1, 1, H, W), jnp.float32) + 0.1
    target = jax.random.uniform(k2, (1, 1, H, W), jnp.float32) + 0.1
    mask = jax.random.uniform(k3, (1, 1, H, W), jnp.float32) > 0.2   # bool mask

    loss = jax.block_until_ready(
        scale_and_shift_invariant_gradient_loss(prediction, target, mask))
    ref = jax.block_until_ready(_reference_loss(prediction, target, mask))
    assert jnp.isfinite(loss), "kernel produced non-finite loss"
    assert jnp.allclose(loss, ref, rtol=5e-4, atol=5e-4), (loss, ref)

    # --- case 2: multi-tile path (exercises row carry, H/W padding, masks) ---
    H2, W2 = 80, 48
    prediction2 = jax.random.uniform(k4, (1, 1, H2, W2), jnp.float32) + 0.1
    target2 = jax.random.uniform(k5, (1, 1, H2, W2), jnp.float32) + 0.1
    mask2 = jax.random.uniform(k6, (1, 1, H2, W2), jnp.float32) > 0.2

    loss2 = jax.block_until_ready(
        scale_and_shift_invariant_gradient_loss(
            prediction2, target2, mask2, tile_rows=32))
    ref2 = jax.block_until_ready(_reference_loss(prediction2, target2, mask2))
    assert jnp.isfinite(loss2), "kernel produced non-finite loss (tiled case)"
    assert jnp.allclose(loss2, ref2, rtol=5e-4, atol=5e-4), (loss2, ref2)

    print("KERNEL_OK")
</pallas_src>

<mosaic_0001>
module attributes {stable_mosaic.version = 11 : i64} {
  func.func @_ssi_loss_kernel(%arg0: i32, %arg1: i32, %arg2: memref<32x128xf32, #tpu.memory_space<vmem>>, %arg3: memref<32x128xf32, #tpu.memory_space<vmem>>, %arg4: memref<32x128xi8, #tpu.memory_space<vmem>>, %arg5: memref<1x1xf32, #tpu.memory_space<vmem>>, %arg6: memref<8x128xf32, #tpu.memory_space<vmem>>, %arg7: memref<8x128xf32, #tpu.memory_space<vmem>>, %arg8: memref<8x128xf32, #tpu.memory_space<vmem>>, %arg9: memref<8x128xf32, #tpu.memory_space<vmem>>, %arg10: memref<8x128xf32, #tpu.memory_space<vmem>>, %arg11: memref<1x1xf32, #tpu.memory_space<vmem>>, %arg12: memref<1x1xf32, #tpu.memory_space<vmem>>, %arg13: memref<1x1xf32, #tpu.memory_space<vmem>>, %arg14: memref<1x1xf32, #tpu.memory_space<vmem>>, %arg15: memref<1x1xf32, #tpu.memory_space<vmem>>, %arg16: memref<1x128xf32, #tpu.memory_space<vmem>>, %arg17: memref<1x128xf32, #tpu.memory_space<vmem>>) attributes {dimension_semantics = [#tpu.dimension_semantics<arbitrary>, #tpu.dimension_semantics<arbitrary>], iteration_bounds = array<i64: 2, 1>, scalar_prefetch = 0 : i64, scratch_operands = 12 : i64, tpu.core_type = #tpu.core_type<tc>, window_params = [{transform_indices = @transform_0, window_bounds = array<i64: 32, 128>}, {transform_indices = @transform_1, window_bounds = array<i64: 32, 128>}, {transform_indices = @transform_2, window_bounds = array<i64: 32, 128>}, {pipeline_mode = #tpu.pipeline_mode<synchronous>, transform_indices = @transform_3, window_bounds = array<i64: 1, 1>}]} {
    %c0_i32 = arith.constant 0 : i32
    %0 = arith.cmpi eq, %arg0, %c0_i32 : i32
    %c0_i32_0 = arith.constant 0 : i32
    %1 = arith.cmpi eq, %arg1, %c0_i32_0 : i32
    %2 = arith.andi %0, %1 : i1
    %3 = arith.extui %2 : i1 to i32
    %c0_i32_1 = arith.constant 0 : i32
    %4 = arith.cmpi ne, %3, %c0_i32_1 : i32
    scf.if %4 {
      %cst = arith.constant 0.000000e+00 : f32
      %26 = vector.broadcast %cst : f32 to vector<8x128xf32>
      %c0 = arith.constant 0 : index
      %c0_14 = arith.constant 0 : index
      %27 = vector.load %arg6[%c0, %c0_14] : memref<8x128xf32, #tpu.memory_space<vmem>>, vector<8x128xf32>
      tpu.vector_store %arg6[%c0, %c0_14], %26 {strides = array<i32>} : memref<8x128xf32, #tpu.memory_space<vmem>>, vector<8x128xf32>,
      %c0_15 = arith.constant 0 : index
      %c0_16 = arith.constant 0 : index
      %28 = vector.load %arg7[%c0_15, %c0_16] : memref<8x128xf32, #tpu.memory_space<vmem>>, vector<8x128xf32>
      tpu.vector_store %arg7[%c0_15, %c0_16], %26 {strides = array<i32>} : memref<8x128xf32, #tpu.memory_space<vmem>>, vector<8x128xf32>,
      %c0_17 = arith.constant 0 : index
      %c0_18 = arith.constant 0 : index
      %29 = vector.load %arg8[%c0_17, %c0_18] : memref<8x128xf32, #tpu.memory_space<vmem>>, vector<8x128xf32>
      tpu.vector_store %arg8[%c0_17, %c0_18], %26 {strides = array<i32>} : memref<8x128xf32, #tpu.memory_space<vmem>>, vector<8x128xf32>,
      %c0_19 = arith.constant 0 : index
      %c0_20 = arith.constant 0 : index
      %30 = vector.load %arg9[%c0_19, %c0_20] : memref<8x128xf32, #tpu.memory_space<vmem>>, vector<8x128xf32>
      tpu.vector_store %arg9[%c0_19, %c0_20], %26 {strides = array<i32>} : memref<8x128xf32, #tpu.memory_space<vmem>>, vector<8x128xf32>,
      %c0_21 = arith.constant 0 : index
      %c0_22 = arith.constant 0 : index
      %31 = vector.load %arg10[%c0_21, %c0_22] : memref<8x128xf32, #tpu.memory_space<vmem>>, vector<8x128xf32>
      tpu.vector_store %arg10[%c0_21, %c0_22], %26 {strides = array<i32>} : memref<8x128xf32, #tpu.memory_space<vmem>>, vector<8x128xf32>,
      %cst_23 = arith.constant 0.000000e+00 : f32
      %32 = vector.broadcast %cst_23 : f32 to vector<1x1xf32>
      %c0_24 = arith.constant 0 : index
      %c0_25 = arith.constant 0 : index
      %33 = vector.load %arg13[%c0_24, %c0_25] : memref<1x1xf32, #tpu.memory_space<vmem>>, vector<1x1xf32>
      tpu.vector_store %arg13[%c0_24, %c0_25], %32 {strides = array<i32>} : memref<1x1xf32, #tpu.memory_space<vmem>>, vector<1x1xf32>,
      %c0_26 = arith.constant 0 : index
      %c0_27 = arith.constant 0 : index
      %34 = vector.load %arg14[%c0_26, %c0_27] : memref<1x1xf32, #tpu.memory_space<vmem>>, vector<1x1xf32>
      tpu.vector_store %arg14[%c0_26, %c0_27], %32 {strides = array<i32>} : memref<1x1xf32, #tpu.memory_space<vmem>>, vector<1x1xf32>,
      %c0_28 = arith.constant 0 : index
      %c0_29 = arith.constant 0 : index
      %35 = vector.load %arg15[%c0_28, %c0_29] : memref<1x1xf32, #tpu.memory_space<vmem>>, vector<1x1xf32>
      tpu.vector_store %arg15[%c0_28, %c0_29], %32 {strides = array<i32>} : memref<1x1xf32, #tpu.memory_space<vmem>>, vector<1x1xf32>,
    } else {
    }
    %c0_i32_2 = arith.constant 0 : i32
    %5 = arith.cmpi eq, %arg0, %c0_i32_2 : i32
    %6 = arith.extui %5 : i1 to i32
    %c0_i32_3 = arith.constant 0 : i32
    %7 = arith.cmpi ne, %6, %c0_i32_3 : i32
    scf.if %7 {
      %cst = arith.constant 0.000000e+00 : f32
      %26 = vector.broadcast %cst : f32 to vector<8x128xf32>
      %c0 = arith.constant 0 : index
      %c0_14 = arith.constant 0 : index
      %27 = vector.load %arg4[%c0, %c0_14] : memref<32x128xi8, #tpu.memory_space<vmem>>, vector<32x128xi8>
      %28 = arith.sitofp %27 : vector<32x128xi8> to vector<32x128xf32>
      %c0_15 = arith.constant 0 : index
      %c0_16 = arith.constant 0 : index
      %29 = vector.load %arg2[%c0_15, %c0_16] : memref<32x128xf32, #tpu.memory_space<vmem>>, vector<32x128xf32>
      %30 = arith.mulf %28, %29 : vector<32x128xf32>
      %31 = arith.mulf %30, %29 : vector<32x128xf32>
      %32 = vector.extract_strided_slice %31 {offsets = [0, 0], sizes = [8, 128], strides = [1, 1]} : vector<32x128xf32> to vector<8x128xf32>
      %33 = vector.extract_strided_slice %31 {offsets = [8, 0], sizes = [8, 128], strides = [1, 1]} : vector<32x128xf32> to vector<8x128xf32>
      %34 = arith.addf %32, %33 : vector<8x128xf32>
      %35 = vector.extract_strided_slice %31 {offsets = [16, 0], sizes = [8, 128], strides = [1, 1]} : vector<32x128xf32> to vector<8x128xf32>
      %36 = vector.extract_strided_slice %31 {offsets = [24, 0], sizes = [8, 128], strides = [1, 1]} : vector<32x128xf32> to vector<8x128xf32>
      %37 = arith.addf %35, %36 : vector<8x128xf32>
      %38 = arith.addf %34, %37 : vector<8x128xf32>
      %39 = arith.addf %26, %38 : vector<8x128xf32>
      %40 = vector.extract_strided_slice %30 {offsets = [0, 0], sizes = [8, 128], strides = [1, 1]} : vector<32x128xf32> to vector<8x128xf32>
      %41 = vector.extract_strided_slice %30 {offsets = [8, 0], sizes = [8, 128], strides = [1, 1]} : vector<32x128xf32> to vector<8x128xf32>
      %42 = arith.addf %40, %41 : vector<8x128xf32>
      %43 = vector.extract_strided_slice %30 {offsets = [16, 0], sizes = [8, 128], strides = [1, 1]} : vector<32x128xf32> to vector<8x128xf32>
      %44 = vector.extract_strided_slice %30 {offsets = [24, 0], sizes = [8, 128], strides = [1, 1]} : vector<32x128xf32> to vector<8x128xf32>
      %45 = arith.addf %43, %44 : vector<8x128xf32>
      %46 = arith.addf %42, %45 : vector<8x128xf32>
      %47 = arith.addf %26, %46 : vector<8x128xf32>
      %48 = vector.extract_strided_slice %28 {offsets = [0, 0], sizes = [8, 128], strides = [1, 1]} : vector<32x128xf32> to vector<8x128xf32>
      %49 = vector.extract_strided_slice %28 {offsets = [8, 0], sizes = [8, 128], strides = [1, 1]} : vector<32x128xf32> to vector<8x128xf32>
      %50 = arith.addf %48, %49 : vector<8x128xf32>
      %51 = vector.extract_strided_slice %28 {offsets = [16, 0], sizes = [8, 128], strides = [1, 1]} : vector<32x128xf32> to vector<8x128xf32>
      %52 = vector.extract_strided_slice %28 {offsets = [24, 0], sizes = [8, 128], strides = [1, 1]} : vector<32x128xf32> to vector<8x128xf32>
      %53 = arith.addf %51, %52 : vector<8x128xf32>
      %54 = arith.addf %50, %53 : vector<8x128xf32>
      %55 = arith.addf %26, %54 : vector<8x128xf32>
      %c0_17 = arith.constant 0 : index
      %c0_18 = arith.constant 0 : index
      %56 = vector.load %arg3[%c0_17, %c0_18] : memref<32x128xf32, #tpu.memory_space<vmem>>, vector<32x128xf32>
      %57 = arith.mulf %30, %56 : vector<32x128xf32>
      %58 = vector.extract_strided_slice %57 {offsets = [0, 0], sizes = [8, 128], strides = [1, 1]} : vector<32x128xf32> to vector<8x128xf32>
      %59 = vector.extract_strided_slice %57 {offsets = [8, 0], sizes = [8, 128], strides = [1, 1]} : vector<32x128xf32> to vector<8x128xf32>
      %60 = arith.addf %58, %59 : vector<8x128xf32>
      %61 = vector.extract_strided_slice %57 {offsets = [16, 0], sizes = [8, 128], strides = [1, 1]} : vector<32x128xf32> to vector<8x128xf32>
      %62 = vector.extract_strided_slice %57 {offsets = [24, 0], sizes = [8, 128], strides = [1, 1]} : vector<32x128xf32> to vector<8x128xf32>
      %63 = arith.addf %61, %62 : vector<8x128xf32>
      %64 = arith.addf %60, %63 : vector<8x128xf32>
      %65 = arith.addf %26, %64 : vector<8x128xf32>
      %66 = arith.mulf %28, %56 : vector<32x128xf32>
      %67 = vector.extract_strided_slice %66 {offsets = [0, 0], sizes = [8, 128], strides = [1, 1]} : vector<32x128xf32> to vector<8x128xf32>
      %68 = vector.extract_strided_slice %66 {offsets = [8, 0], sizes = [8, 128], strides = [1, 1]} : vector<32x128xf32> to vector<8x128xf32>
      %69 = arith.addf %67, %68 : vector<8x128xf32>
      %70 = vector.extract_strided_slice %66 {offsets = [16, 0], sizes = [8, 128], strides = [1, 1]} : vector<32x128xf32> to vector<8x128xf32>
      %71 = vector.extract_strided_slice %66 {offsets = [24, 0], sizes = [8, 128], strides = [1, 1]} : vector<32x128xf32> to vector<8x128xf32>
      %72 = arith.addf %70, %71 : vector<8x128xf32>
      %73 = arith.addf %69, %72 : vector<8x128xf32>
      %74 = arith.addf %26, %73 : vector<8x128xf32>
      %c0_19 = arith.constant 0 : index
      %c0_20 = arith.constant 0 : index
      %75 = vector.load %arg6[%c0_19, %c0_20] : memref<8x128xf32, #tpu.memory_space<vmem>>, vector<8x128xf32>
      %76 = arith.addf %75, %39 : vector<8x128xf32>
      %c0_21 = arith.constant 0 : index
      %c0_22 = arith.constant 0 : index
      %77 = vector.load %arg6[%c0_21, %c0_22] : memref<8x128xf32, #tpu.memory_space<vmem>>, vector<8x128xf32>
      tpu.vector_store %arg6[%c0_21, %c0_22], %76 {strides = array<i32>} : memref<8x128xf32, #tpu.memory_space<vmem>>, vector<8x128xf32>,
      %c0_23 = arith.constant 0 : index
      %c0_24 = arith.constant 0 : index
      %78 = vector.load %arg7[%c0_23, %c0_24] : memref<8x128xf32, #tpu.memory_space<vmem>>, vector<8x128xf32>
      %79 = arith.addf %78, %47 : vector<8x128xf32>
      %c0_25 = arith.constant 0 : index
      %c0_26 = arith.constant 0 : index
      %80 = vector.load %arg7[%c0_25, %c0_26] : memref<8x128xf32, #tpu.memory_space<vmem>>, vector<8x128xf32>
      tpu.vector_store %arg7[%c0_25, %c0_26], %79 {strides = array<i32>} : memref<8x128xf32, #tpu.memory_space<vmem>>, vector<8x128xf32>,
      %c0_27 = arith.constant 0 : index
      %c0_28 = arith.constant 0 : index
      %81 = vector.load %arg8[%c0_27, %c0_28] : memref<8x128xf32, #tpu.memory_space<vmem>>, vector<8x128xf32>
      %82 = arith.addf %81, %55 : vector<8x128xf32>
      %c0_29 = arith.constant 0 : index
      %c0_30 = arith.constant 0 : index
      %83 = vector.load %arg8[%c0_29, %c0_30] : memref<8x128xf32, #tpu.memory_space<vmem>>, vector<8x128xf32>
      tpu.vector_store %arg8[%c0_29, %c0_30], %82 {strides = array<i32>} : memref<8x128xf32, #tpu.memory_space<vmem>>, vector<8x128xf32>,
      %c0_31 = arith.constant 0 : index
      %c0_32 = arith.constant 0 : index
      %84 = vector.load %arg9[%c0_31, %c0_32] : memref<8x128xf32, #tpu.memory_space<vmem>>, vector<8x128xf32>
      %85 = arith.addf %84, %65 : vector<8x128xf32>
      %c0_33 = arith.constant 0 : index
      %c0_34 = arith.constant 0 : index
      %86 = vector.load %arg9[%c0_33, %c0_34] : memref<8x128xf32, #tpu.memory_space<vmem>>, vector<8x128xf32>
      tpu.vector_store %arg9[%c0_33, %c0_34], %85 {strides = array<i32>} : memref<8x128xf32, #tpu.memory_space<vmem>>, vector<8x128xf32>,
      %c0_35 = arith.constant 0 : index
      %c0_36 = arith.constant 0 : index
      %87 = vector.load %arg10[%c0_35, %c0_36] : memref<8x128xf32, #tpu.memory_space<vmem>>, vector<8x128xf32>
      %88 = arith.addf %87, %74 : vector<8x128xf32>
      %c0_37 = arith.constant 0 : index
      %c0_38 = arith.constant 0 : index
      %89 = vector.load %arg10[%c0_37, %c0_38] : memref<8x128xf32, #tpu.memory_space<vmem>>, vector<8x128xf32>
      tpu.vector_store %arg10[%c0_37, %c0_38], %88 {strides = array<i32>} : memref<8x128xf32, #tpu.memory_space<vmem>>, vector<8x128xf32>,
    } else {
    }
    %c0_i32_4 = arith.constant 0 : i32
    %8 = arith.cmpi eq, %arg0, %c0_i32_4 : i32
    %c0_i32_5 = arith.constant 0 : i32
    %9 = arith.cmpi eq, %arg1, %c0_i32_5 : i32
    %10 = arith.andi %8, %9 : i1
    %11 = arith.extui %10 : i1 to i32
    %c0_i32_6 = arith.constant 0 : i32
    %12 = arith.cmpi ne, %11, %c0_i32_6 : i32
    scf.if %12 {
      %c0 = arith.constant 0 : index
      %c0_14 = arith.constant 0 : index
      %26 = vector.load %arg6[%c0, %c0_14] : memref<8x128xf32, #tpu.memory_space<vmem>>, vector<8x128xf32>
      %cst = arith.constant dense<0.000000e+00> : vector<8xf32>
      %27 = vector.multi_reduction <add>, %26, %cst [1] : vector<8x128xf32> to vector<8xf32>
      %28 = vector.shape_cast %27 : vector<8xf32> to vector<8x1xf32>
      %cst_15 = arith.constant dense<0.000000e+00> : vector<1xf32>
      %29 = vector.multi_reduction <add>, %28, %cst_15 [0] : vector<8x1xf32> to vector<1xf32>
      %30 = vector.shape_cast %29 : vector<1xf32> to vector<1x1xf32>
      %c0_16 = arith.constant 0 : index
      %c0_17 = arith.constant 0 : index
      %31 = vector.load %arg7[%c0_16, %c0_17] : memref<8x128xf32, #tpu.memory_space<vmem>>, vector<8x128xf32>
      %cst_18 = arith.constant dense<0.000000e+00> : vector<8xf32>
      %32 = vector.multi_reduction <add>, %31, %cst_18 [1] : vector<8x128xf32> to vector<8xf32>
      %33 = vector.shape_cast %32 : vector<8xf32> to vector<8x1xf32>
      %cst_19 = arith.constant dense<0.000000e+00> : vector<1xf32>
      %34 = vector.multi_reduction <add>, %33, %cst_19 [0] : vector<8x1xf32> to vector<1xf32>
      %35 = vector.shape_cast %34 : vector<1xf32> to vector<1x1xf32>
      %c0_20 = arith.constant 0 : index
      %c0_21 = arith.constant 0 : index
      %36 = vector.load %arg8[%c0_20, %c0_21] : memref<8x128xf32, #tpu.memory_space<vmem>>, vector<8x128xf32>
      %cst_22 = arith.constant dense<0.000000e+00> : vector<8xf32>
      %37 = vector.multi_reduction <add>, %36, %cst_22 [1] : vector<8x128xf32> to vector<8xf32>
      %38 = vector.shape_cast %37 : vector<8xf32> to vector<8x1xf32>
      %cst_23 = arith.constant dense<0.000000e+00> : vector<1xf32>
      %39 = vector.multi_reduction <add>, %38, %cst_23 [0] : vector<8x1xf32> to vector<1xf32>
      %40 = vector.shape_cast %39 : vector<1xf32> to vector<1x1xf32>
      %c0_24 = arith.constant 0 : index
      %c0_25 = arith.constant 0 : index
      %41 = vector.load %arg9[%c0_24, %c0_25] : memref<8x128xf32, #tpu.memory_space<vmem>>, vector<8x128xf32>
      %cst_26 = arith.constant dense<0.000000e+00> : vector<8xf32>
      %42 = vector.multi_reduction <add>, %41, %cst_26 [1] : vector<8x128xf32> to vector<8xf32>
      %43 = vector.shape_cast %42 : vector<8xf32> to vector<8x1xf32>
      %cst_27 = arith.constant dense<0.000000e+00> : vector<1xf32>
      %44 = vector.multi_reduction <add>, %43, %cst_27 [0] : vector<8x1xf32> to vector<1xf32>
      %45 = vector.shape_cast %44 : vector<1xf32> to vector<1x1xf32>
      %c0_28 = arith.constant 0 : index
      %c0_29 = arith.constant 0 : index
      %46 = vector.load %arg10[%c0_28, %c0_29] : memref<8x128xf32, #tpu.memory_space<vmem>>, vector<8x128xf32>
      %cst_30 = arith.constant dense<0.000000e+00> : vector<8xf32>
      %47 = vector.multi_reduction <add>, %46, %cst_30 [1] : vector<8x128xf32> to vector<8xf32>
      %48 = vector.shape_cast %47 : vector<8xf32> to vector<8x1xf32>
      %cst_31 = arith.constant dense<0.000000e+00> : vector<1xf32>
      %49 = vector.multi_reduction <add>, %48, %cst_31 [0] : vector<8x1xf32> to vector<1xf32>
      %50 = vector.shape_cast %49 : vector<1xf32> to vector<1x1xf32>
      %51 = arith.mulf %30, %40 : vector<1x1xf32>
      %52 = arith.mulf %35, %35 : vector<1x1xf32>
      %53 = arith.subf %51, %52 : vector<1x1xf32>
      %cst_32 = arith.constant 0.000000e+00 : f32
      %54 = vector.broadcast %cst_32 : f32 to vector<1x1xf32>
      %55 = arith.cmpf ogt, %53, %54 : vector<1x1xf32>
      %cst_33 = arith.constant 1.000000e+00 : f32
      %56 = vector.broadcast %cst_33 : f32 to vector<1x1xf32>
      %57 = arith.select %55, %53, %56 : vector<1x1xi1>, vector<1x1xf32>
      %58 = arith.mulf %40, %45 : vector<1x1xf32>
      %59 = arith.mulf %35, %50 : vector<1x1xf32>
      %60 = arith.subf %58, %59 : vector<1x1xf32>
      %61 = arith.divf %60, %57 : vector<1x1xf32>
      %cst_34 = arith.constant 0.000000e+00 : f32
      %62 = vector.broadcast %cst_34 : f32 to vector<1x1xf32>
      %63 = arith.select %55, %61, %62 : vector<1x1xi1>, vector<1x1xf32>
      %c0_35 = arith.constant 0 : index
      %c0_36 = arith.constant 0 : index
      %64 = vector.load %arg11[%c0_35, %c0_36] : memref<1x1xf32, #tpu.memory_space<vmem>>, vector<1x1xf32>
      tpu.vector_store %arg11[%c0_35, %c0_36], %63 {strides = array<i32>} : memref<1x1xf32, #tpu.memory_space<vmem>>, vector<1x1xf32>,
      %cst_37 = arith.constant 0.000000e+00 : f32
      %65 = vector.broadcast %cst_37 : f32 to vector<1x1xf32>
      %66 = arith.subf %65, %35 : vector<1x1xf32>
      %67 = arith.mulf %66, %45 : vector<1x1xf32>
      %68 = arith.mulf %30, %50 : vector<1x1xf32>
      %69 = arith.addf %67, %68 : vector<1x1xf32>
      %70 = arith.divf %69, %57 : vector<1x1xf32>
      %cst_38 = arith.constant 0.000000e+00 : f32
      %71 = vector.broadcast %cst_38 : f32 to vector<1x1xf32>
      %72 = arith.select %55, %70, %71 : vector<1x1xi1>, vector<1x1xf32>
      %c0_39 = arith.constant 0 : index
      %c0_40 = arith.constant 0 : index
      %73 = vector.load %arg12[%c0_39, %c0_40] : memref<1x1xf32, #tpu.memory_space<vmem>>, vector<1x1xf32>
      tpu.vector_store %arg12[%c0_39, %c0_40], %72 {strides = array<i32>} : memref<1x1xf32, #tpu.memory_space<vmem>>, vector<1x1xf32>,
    } else {
    }
    %c1_i32 = arith.constant 1 : i32
    %13 = arith.cmpi eq, %arg0, %c1_i32 : i32
    %c0_i32_7 = arith.constant 0 : i32
    %14 = arith.cmpi eq, %arg1, %c0_i32_7 : i32
    %15 = arith.andi %13, %14 : i1
    %16 = arith.extui %15 : i1 to i32
    %c0_i32_8 = arith.constant 0 : i32
    %17 = arith.cmpi ne, %16, %c0_i32_8 : i32
    scf.if %17 {
      %cst = arith.constant 0.000000e+00 : f32
      %26 = vector.broadcast %cst : f32 to vector<1x128xf32>
      %c0 = arith.constant 0 : index
      %c0_14 = arith.constant 0 : index
      %27 = vector.load %arg16[%c0, %c0_14] : memref<1x128xf32, #tpu.memory_space<vmem>>, vector<1x128xf32>
      tpu.vector_store %arg16[%c0, %c0_14], %26 {strides = array<i32>} : memref<1x128xf32, #tpu.memory_space<vmem>>, vector<1x128xf32>,
      %c0_15 = arith.constant 0 : index
      %c0_16 = arith.constant 0 : index
      %28 = vector.load %arg17[%c0_15, %c0_16] : memref<1x128xf32, #tpu.memory_space<vmem>>, vector<1x128xf32>
      tpu.vector_store %arg17[%c0_15, %c0_16], %26 {strides = array<i32>} : memref<1x128xf32, #tpu.memory_space<vmem>>, vector<1x128xf32>,
    } else {
    }
    %c1_i32_9 = arith.constant 1 : i32
    %18 = arith.cmpi eq, %arg0, %c1_i32_9 : i32
    %19 = arith.extui %18 : i1 to i32
    %c0_i32_10 = arith.constant 0 : i32
    %20 = arith.cmpi ne, %19, %c0_i32_10 : i32
    scf.if %20 {
      %c0 = arith.constant 0 : index
      %c0_14 = arith.constant 0 : index
      %26 = vector.load %arg11[%c0, %c0_14] : memref<1x1xf32, #tpu.memory_space<vmem>>, vector<1x1xf32>
      %c0_15 = arith.constant 0 : index
      %c0_16 = arith.constant 0 : index
      %27 = vector.load %arg12[%c0_15, %c0_16] : memref<1x1xf32, #tpu.memory_space<vmem>>, vector<1x1xf32>
      %28 = tpu.iota {dimensions = array<i32: 1>} : vector<8x128xi32>
      %c1_i32_17 = arith.constant 1 : i32
      %29 = vector.broadcast %c1_i32_17 : i32 to vector<8x128xi32>
      %30 = arith.cmpi sge, %28, %29 : vector<8x128xi32>
      %c16_i32 = arith.constant 16 : i32
      %31 = vector.broadcast %c16_i32 : i32 to vector<8x128xi32>
      %32 = arith.cmpi slt, %28, %31 : vector<8x128xi32>
      %33 = arith.andi %30, %32 : vector<8x128xi1>
      %34 = tpu.iota {dimensions = array<i32: 0>} : vector<8x128xi32>
      %c0_i32_18 = arith.constant 0 : i32
      %35 = vector.broadcast %c0_i32_18 : i32 to vector<8x128xi32>
      %36 = arith.cmpi eq, %34, %35 : vector<8x128xi32>
      %37 = tpu.iota {dimensions = array<i32: 0>} : vector<8x1xi32>
      %c32_i32 = arith.constant 32 : i32
      %38 = arith.muli %arg1, %c32_i32 : i32
      %cst = arith.constant 0.000000e+00 : f32
      %39 = vector.broadcast %cst : f32 to vector<8x128xf32>
      %c0_19 = arith.constant 0 : index
      %c0_20 = arith.constant 0 : index
      %40 = vector.load %arg16[%c0_19, %c0_20] : memref<1x128xf32, #tpu.memory_space<vmem>>, vector<1x128xf32>
      %c0_21 = arith.constant 0 : index
      %c0_22 = arith.constant 0 : index
      %41 = vector.load %arg17[%c0_21, %c0_22] : memref<1x128xf32, #tpu.memory_space<vmem>>, vector<1x128xf32>
      %c0_23 = arith.constant 0 : index
      %c0_24 = arith.constant 0 : index
      %42 = vector.load %arg2[%c0_23, %c0_24] : memref<32x128xf32, #tpu.memory_space<vmem>>, vector<8x128xf32>
      %c0_25 = arith.constant 0 : index
      %c0_26 = arith.constant 0 : index
      %43 = vector.load %arg3[%c0_25, %c0_26] : memref<32x128xf32, #tpu.memory_space<vmem>>, vector<8x128xf32>
      %44 = vector.broadcast %26 : vector<1x1xf32> to vector<8x128xf32>
      %45 = arith.mulf %44, %42 : vector<8x128xf32>
      %46 = vector.broadcast %27 : vector<1x1xf32> to vector<8x128xf32>
      %47 = arith.addf %45, %46 : vector<8x128xf32>
      %c0_i32_27 = arith.constant 0 : i32
      %48 = arith.addi %38, %c0_i32_27 : i32
      %49 = vector.broadcast %48 : i32 to vector<8x1xi32>
      %50 = arith.addi %37, %49 : vector<8x1xi32>
      %c16_i32_28 = arith.constant 16 : i32
      %51 = vector.broadcast %c16_i32_28 : i32 to vector<8x1xi32>
      %52 = arith.cmpi slt, %50, %51 : vector<8x1xi32>
      %c1_i32_29 = arith.constant 1 : i32
      %53 = vector.broadcast %c1_i32_29 : i32 to vector<8x1xi32>
      %54 = arith.cmpi sge, %50, %53 : vector<8x1xi32>
      %55 = arith.andi %54, %52 : vector<8x1xi1>
      %56 = arith.subf %47, %43 : vector<8x128xf32>
      %57 = math.absf %56 : vector<8x128xf32>
      %cst_30 = arith.constant 0.000000e+00 : f32
      %58 = vector.broadcast %cst_30 : f32 to vector<8x128xf32>
      %59 = arith.select %32, %57, %58 : vector<8x128xi1>, vector<8x128xf32>
      %cst_31 = arith.constant 0.000000e+00 : f32
      %60 = vector.shape_cast %52 : vector<8x1xi1> to vector<8x1xi1>
      %61 = vector.broadcast %60 : vector<8x1xi1> to vector<8x128xi1>
      %62 = vector.broadcast %cst_31 : f32 to vector<8x128xf32>
      %63 = arith.select %61, %59, %62 : vector<8x128xi1>, vector<8x128xf32>
      %64 = arith.addf %39, %63 : vector<8x128xf32>
      %c1_i32_32 = arith.constant 1 : i32
      %65 = tpu.dynamic_rotate %43 by %c1_i32_32 dim 1 : vector<8x128xf32>, i32 -> vector<8x128xf32>
      %c1_i32_33 = arith.constant 1 : i32
      %66 = tpu.dynamic_rotate %43 by %c1_i32_33 dim 0 : vector<8x128xf32>, i32 -> vector<8x128xf32>
      %67 = vector.shape_cast %40 : vector<1x128xf32> to vector<1x128xf32>
      %68 = vector.broadcast %67 : vector<1x128xf32> to vector<8x128xf32>
      %69 = arith.select %36, %68, %66 : vector<8x128xi1>, vector<8x128xf32>
      %70 = arith.subf %43, %65 : vector<8x128xf32>
      %71 = arith.subf %43, %69 : vector<8x128xf32>
      %72 = arith.mulf %70, %70 : vector<8x128xf32>
      %73 = arith.mulf %71, %71 : vector<8x128xf32>
      %74 = arith.addf %72, %73 : vector<8x128xf32>
      %cst_34 = arith.constant 9.99999997E-7 : f32
      %75 = vector.broadcast %cst_34 : f32 to vector<8x128xf32>
      %76 = arith.addf %70, %75 : vector<8x128xf32>
      %77 = tpu.reciprocal %76 {approx = true} : vector<8x128xf32> -> vector<8x128xf32>
      %78 = arith.mulf %76, %77 : vector<8x128xf32>
      %cst_35 = arith.constant 2.000000e+00 : f32
      %79 = vector.broadcast %cst_35 : f32 to vector<8x128xf32>
      %80 = arith.subf %79, %78 : vector<8x128xf32>
      %81 = arith.mulf %77, %80 : vector<8x128xf32>
      %82 = arith.cmpf oeq, %81, %81 : vector<8x128xf32>
      %83 = arith.select %82, %81, %77 : vector<8x128xi1>, vector<8x128xf32>
      %84 = arith.mulf %71, %83 : vector<8x128xf32>
      %85 = math.absf %84 : vector<8x128xf32>
      %cst_36 = arith.constant 2.41421366 : f32
      %86 = vector.broadcast %cst_36 : f32 to vector<8x128xf32>
      %87 = arith.cmpf ogt, %85, %86 : vector<8x128xf32>
      %cst_37 = arith.constant 0.414213568 : f32
      %88 = vector.broadcast %cst_37 : f32 to vector<8x128xf32>
      %89 = arith.cmpf ogt, %85, %88 : vector<8x128xf32>
      %cst_38 = arith.constant 1.000000e+00 : f32
      %90 = vector.broadcast %cst_38 : f32 to vector<8x128xf32>
      %91 = arith.addf %85, %90 : vector<8x128xf32>
      %92 = arith.select %87, %85, %91 : vector<8x128xi1>, vector<8x128xf32>
      %93 = tpu.reciprocal %92 {approx = true} : vector<8x128xf32> -> vector<8x128xf32>
      %94 = arith.mulf %92, %93 : vector<8x128xf32>
      %cst_39 = arith.constant 2.000000e+00 : f32
      %95 = vector.broadcast %cst_39 : f32 to vector<8x128xf32>
      %96 = arith.subf %95, %94 : vector<8x128xf32>
      %97 = arith.mulf %93, %96 : vector<8x128xf32>
      %98 = arith.cmpf oeq, %97, %97 : vector<8x128xf32>
      %99 = arith.select %98, %97, %93 : vector<8x128xi1>, vector<8x128xf32>
      %cst_40 = arith.constant 0.000000e+00 : f32
      %100 = vector.broadcast %cst_40 : f32 to vector<8x128xf32>
      %101 = arith.subf %100, %99 : vector<8x128xf32>
      %cst_41 = arith.constant 1.000000e+00 : f32
      %102 = vector.broadcast %cst_41 : f32 to vector<8x128xf32>
      %103 = arith.subf %85, %102 : vector<8x128xf32>
      %104 = arith.mulf %103, %99 : vector<8x128xf32>
      %105 = arith.select %89, %104, %85 : vector<8x128xi1>, vector<8x128xf32>
      %106 = arith.select %87, %101, %105 : vector<8x128xi1>, vector<8x128xf32>
      %cst_42 = arith.constant 0.785398185 : f32
      %cst_43 = arith.constant 0.000000e+00 : f32
      %107 = vector.broadcast %cst_42 : f32 to vector<8x128xf32>
      %108 = vector.broadcast %cst_43 : f32 to vector<8x128xf32>
      %109 = arith.select %89, %107, %108 : vector<8x128xi1>, vector<8x128xf32>
      %cst_44 = arith.constant 1.57079637 : f32
      %110 = vector.broadcast %cst_44 : f32 to vector<8x128xf32>
      %111 = arith.select %87, %110, %109 : vector<8x128xi1>, vector<8x128xf32>
      %112 = arith.mulf %106, %106 : vector<8x128xf32>
      %cst_45 = arith.constant 0.0805374458 : f32
      %113 = vector.broadcast %cst_45 : f32 to vector<8x128xf32>
      %114 = arith.mulf %113, %112 : vector<8x128xf32>
      %cst_46 = arith.constant 0.138776854 : f32
      %115 = vector.broadcast %cst_46 : f32 to vector<8x128xf32>
      %116 = arith.subf %114, %115 : vector<8x128xf32>
      %117 = arith.mulf %116, %112 : vector<8x128xf32>
      %cst_47 = arith.constant 0.199777111 : f32
      %118 = vector.broadcast %cst_47 : f32 to vector<8x128xf32>
      %119 = arith.addf %117, %118 : vector<8x128xf32>
      %120 = arith.mulf %119, %112 : vector<8x128xf32>
      %cst_48 = arith.constant 0.333329499 : f32
      %121 = vector.broadcast %cst_48 : f32 to vector<8x128xf32>
      %122 = arith.subf %120, %121 : vector<8x128xf32>
      %123 = arith.mulf %122, %112 : vector<8x128xf32>
      %124 = arith.mulf %123, %106 : vector<8x128xf32>
      %125 = arith.addf %124, %106 : vector<8x128xf32>
      %126 = arith.addf %111, %125 : vector<8x128xf32>
      %127 = tpu.bitcast %84 : vector<8x128xf32> -> vector<8x128xi32>
      %c-2147483648_i32 = arith.constant -2147483648 : i32
      %128 = vector.broadcast %c-2147483648_i32 : i32 to vector<8x128xi32>
      %129 = arith.andi %127, %128 : vector<8x128xi32>
      %130 = tpu.bitcast %126 : vector<8x128xf32> -> vector<8x128xi32>
      %131 = arith.xori %130, %129 : vector<8x128xi32>
      %132 = tpu.bitcast %131 : vector<8x128xi32> -> vector<8x128xf32>
      %c1_i32_49 = arith.constant 1 : i32
      %133 = tpu.dynamic_rotate %47 by %c1_i32_49 dim 1 : vector<8x128xf32>, i32 -> vector<8x128xf32>
      %c1_i32_50 = arith.constant 1 : i32
      %134 = tpu.dynamic_rotate %47 by %c1_i32_50 dim 0 : vector<8x128xf32>, i32 -> vector<8x128xf32>
      %135 = vector.shape_cast %41 : vector<1x128xf32> to vector<1x128xf32>
      %136 = vector.broadcast %135 : vector<1x128xf32> to vector<8x128xf32>
      %137 = arith.select %36, %136, %134 : vector<8x128xi1>, vector<8x128xf32>
      %138 = arith.subf %47, %133 : vector<8x128xf32>
      %139 = arith.subf %47, %137 : vector<8x128xf32>
      %140 = arith.mulf %138, %138 : vector<8x128xf32>
      %141 = arith.mulf %139, %139 : vector<8x128xf32>
      %142 = arith.addf %140, %141 : vector<8x128xf32>
      %cst_51 = arith.constant 9.99999997E-7 : f32
      %143 = vector.broadcast %cst_51 : f32 to vector<8x128xf32>
      %144 = arith.addf %138, %143 : vector<8x128xf32>
      %145 = tpu.reciprocal %144 {approx = true} : vector<8x128xf32> -> vector<8x128xf32>
      %146 = arith.mulf %144, %145 : vector<8x128xf32>
      %cst_52 = arith.constant 2.000000e+00 : f32
      %147 = vector.broadcast %cst_52 : f32 to vector<8x128xf32>
      %148 = arith.subf %147, %146 : vector<8x128xf32>
      %149 = arith.mulf %145, %148 : vector<8x128xf32>
      %150 = arith.cmpf oeq, %149, %149 : vector<8x128xf32>
      %151 = arith.select %150, %149, %145 : vector<8x128xi1>, vector<8x128xf32>
      %152 = arith.mulf %139, %151 : vector<8x128xf32>
      %153 = math.absf %152 : vector<8x128xf32>
      %cst_53 = arith.constant 2.41421366 : f32
      %154 = vector.broadcast %cst_53 : f32 to vector<8x128xf32>
      %155 = arith.cmpf ogt, %153, %154 : vector<8x128xf32>
      %cst_54 = arith.constant 0.414213568 : f32
      %156 = vector.broadcast %cst_54 : f32 to vector<8x128xf32>
      %157 = arith.cmpf ogt, %153, %156 : vector<8x128xf32>
      %cst_55 = arith.constant 1.000000e+00 : f32
      %158 = vector.broadcast %cst_55 : f32 to vector<8x128xf32>
      %159 = arith.addf %153, %158 : vector<8x128xf32>
      %160 = arith.select %155, %153, %159 : vector<8x128xi1>, vector<8x128xf32>
      %161 = tpu.reciprocal %160 {approx = true} : vector<8x128xf32> -> vector<8x128xf32>
      %162 = arith.mulf %160, %161 : vector<8x128xf32>
      %cst_56 = arith.constant 2.000000e+00 : f32
      %163 = vector.broadcast %cst_56 : f32 to vector<8x128xf32>
      %164 = arith.subf %163, %162 : vector<8x128xf32>
      %165 = arith.mulf %161, %164 : vector<8x128xf32>
      %166 = arith.cmpf oeq, %165, %165 : vector<8x128xf32>
      %167 = arith.select %166, %165, %161 : vector<8x128xi1>, vector<8x128xf32>
      %cst_57 = arith.constant 0.000000e+00 : f32
      %168 = vector.broadcast %cst_57 : f32 to vector<8x128xf32>
      %169 = arith.subf %168, %167 : vector<8x128xf32>
      %cst_58 = arith.constant 1.000000e+00 : f32
      %170 = vector.broadcast %cst_58 : f32 to vector<8x128xf32>
      %171 = arith.subf %153, %170 : vector<8x128xf32>
      %172 = arith.mulf %171, %167 : vector<8x128xf32>
      %173 = arith.select %157, %172, %153 : vector<8x128xi1>, vector<8x128xf32>
      %174 = arith.select %155, %169, %173 : vector<8x128xi1>, vector<8x128xf32>
      %cst_59 = arith.constant 0.785398185 : f32
      %cst_60 = arith.constant 0.000000e+00 : f32
      %175 = vector.broadcast %cst_59 : f32 to vector<8x128xf32>
      %176 = vector.broadcast %cst_60 : f32 to vector<8x128xf32>
      %177 = arith.select %157, %175, %176 : vector<8x128xi1>, vector<8x128xf32>
      %cst_61 = arith.constant 1.57079637 : f32
      %178 = vector.broadcast %cst_61 : f32 to vector<8x128xf32>
      %179 = arith.select %155, %178, %177 : vector<8x128xi1>, vector<8x128xf32>
      %180 = arith.mulf %174, %174 : vector<8x128xf32>
      %cst_62 = arith.constant 0.0805374458 : f32
      %181 = vector.broadcast %cst_62 : f32 to vector<8x128xf32>
      %182 = arith.mulf %181, %180 : vector<8x128xf32>
      %cst_63 = arith.constant 0.138776854 : f32
      %183 = vector.broadcast %cst_63 : f32 to vector<8x128xf32>
      %184 = arith.subf %182, %183 : vector<8x128xf32>
      %185 = arith.mulf %184, %180 : vector<8x128xf32>
      %cst_64 = arith.constant 0.199777111 : f32
      %186 = vector.broadcast %cst_64 : f32 to vector<8x128xf32>
      %187 = arith.addf %185, %186 : vector<8x128xf32>
      %188 = arith.mulf %187, %180 : vector<8x128xf32>
      %cst_65 = arith.constant 0.333329499 : f32
      %189 = vector.broadcast %cst_65 : f32 to vector<8x128xf32>
      %190 = arith.subf %188, %189 : vector<8x128xf32>
      %191 = arith.mulf %190, %180 : vector<8x128xf32>
      %192 = arith.mulf %191, %174 : vector<8x128xf32>
      %193 = arith.addf %192, %174 : vector<8x128xf32>
      %194 = arith.addf %179, %193 : vector<8x128xf32>
      %195 = tpu.bitcast %152 : vector<8x128xf32> -> vector<8x128xi32>
      %c-2147483648_i32_66 = arith.constant -2147483648 : i32
      %196 = vector.broadcast %c-2147483648_i32_66 : i32 to vector<8x128xi32>
      %197 = arith.andi %195, %196 : vector<8x128xi32>
      %198 = tpu.bitcast %194 : vector<8x128xf32> -> vector<8x128xi32>
      %199 = arith.xori %198, %197 : vector<8x128xi32>
      %200 = tpu.bitcast %199 : vector<8x128xi32> -> vector<8x128xf32>
      %201 = vector.broadcast %55 : vector<8x1xi1> to vector<8x128xi1>
      %202 = arith.andi %201, %33 : vector<8x128xi1>
      %203 = arith.subf %142, %74 : vector<8x128xf32>
      %204 = math.absf %203 : vector<8x128xf32>
      %cst_67 = arith.constant 0.000000e+00 : f32
      %205 = vector.broadcast %cst_67 : f32 to vector<8x128xf32>
      %206 = arith.select %202, %204, %205 : vector<8x128xi1>, vector<8x128xf32>
      %207 = arith.addf %39, %206 : vector<8x128xf32>
      %208 = arith.subf %200, %132 : vector<8x128xf32>
      %209 = math.absf %208 : vector<8x128xf32>
      %cst_68 = arith.constant 0.000000e+00 : f32
      %210 = vector.broadcast %cst_68 : f32 to vector<8x128xf32>
      %211 = arith.select %202, %209, %210 : vector<8x128xi1>, vector<8x128xf32>
      %212 = arith.addf %39, %211 : vector<8x128xf32>
      %213 = vector.extract_strided_slice %43 {offsets = [7, 0], sizes = [1, 128], strides = [1, 1]} : vector<8x128xf32> to vector<1x128xf32>
      %214 = vector.extract_strided_slice %47 {offsets = [7, 0], sizes = [1, 128], strides = [1, 1]} : vector<8x128xf32> to vector<1x128xf32>
      %c8 = arith.constant 8 : index
      %c0_69 = arith.constant 0 : index
      %215 = vector.load %arg2[%c8, %c0_69] : memref<32x128xf32, #tpu.memory_space<vmem>>, vector<8x128xf32>
      %c8_70 = arith.constant 8 : index
      %c0_71 = arith.constant 0 : index
      %216 = vector.load %arg3[%c8_70, %c0_71] : memref<32x128xf32, #tpu.memory_space<vmem>>, vector<8x128xf32>
      %217 = vector.broadcast %26 : vector<1x1xf32> to vector<8x128xf32>
      %218 = arith.mulf %217, %215 : vector<8x128xf32>
      %219 = vector.broadcast %27 : vector<1x1xf32> to vector<8x128xf32>
      %220 = arith.addf %218, %219 : vector<8x128xf32>
      %c8_i32 = arith.constant 8 : i32
      %221 = arith.addi %38, %c8_i32 : i32
      %222 = vector.broadcast %221 : i32 to vector<8x1xi32>
      %223 = arith.addi %37, %222 : vector<8x1xi32>
      %c16_i32_72 = arith.constant 16 : i32
      %224 = vector.broadcast %c16_i32_72 : i32 to vector<8x1xi32>
      %225 = arith.cmpi slt, %223, %224 : vector<8x1xi32>
      %c1_i32_73 = arith.constant 1 : i32
      %226 = vector.broadcast %c1_i32_73 : i32 to vector<8x1xi32>
      %227 = arith.cmpi sge, %223, %226 : vector<8x1xi32>
      %228 = arith.andi %227, %225 : vector<8x1xi1>
      %229 = arith.subf %220, %216 : vector<8x128xf32>
      %230 = math.absf %229 : vector<8x128xf32>
      %cst_74 = arith.constant 0.000000e+00 : f32
      %231 = vector.broadcast %cst_74 : f32 to vector<8x128xf32>
      %232 = arith.select %32, %230, %231 : vector<8x128xi1>, vector<8x128xf32>
      %cst_75 = arith.constant 0.000000e+00 : f32
      %233 = vector.shape_cast %225 : vector<8x1xi1> to vector<8x1xi1>
      %234 = vector.broadcast %233 : vector<8x1xi1> to vector<8x128xi1>
      %235 = vector.broadcast %cst_75 : f32 to vector<8x128xf32>
      %236 = arith.select %234, %232, %235 : vector<8x128xi1>, vector<8x128xf32>
      %237 = arith.addf %64, %236 : vector<8x128xf32>
      %c1_i32_76 = arith.constant 1 : i32
      %238 = tpu.dynamic_rotate %216 by %c1_i32_76 dim 1 : vector<8x128xf32>, i32 -> vector<8x128xf32>
      %c1_i32_77 = arith.constant 1 : i32
      %239 = tpu.dynamic_rotate %216 by %c1_i32_77 dim 0 : vector<8x128xf32>, i32 -> vector<8x128xf32>
      %240 = vector.shape_cast %213 : vector<1x128xf32> to vector<1x128xf32>
      %241 = vector.broadcast %240 : vector<1x128xf32> to vector<8x128xf32>
      %242 = arith.select %36, %241, %239 : vector<8x128xi1>, vector<8x128xf32>
      %243 = arith.subf %216, %238 : vector<8x128xf32>
      %244 = arith.subf %216, %242 : vector<8x128xf32>
      %245 = arith.mulf %243, %243 : vector<8x128xf32>
      %246 = arith.mulf %244, %244 : vector<8x128xf32>
      %247 = arith.addf %245, %246 : vector<8x128xf32>
      %cst_78 = arith.constant 9.99999997E-7 : f32
      %248 = vector.broadcast %cst_78 : f32 to vector<8x128xf32>
      %249 = arith.addf %243, %248 : vector<8x128xf32>
      %250 = tpu.reciprocal %249 {approx = true} : vector<8x128xf32> -> vector<8x128xf32>
      %251 = arith.mulf %249, %250 : vector<8x128xf32>
      %cst_79 = arith.constant 2.000000e+00 : f32
      %252 = vector.broadcast %cst_79 : f32 to vector<8x128xf32>
      %253 = arith.subf %252, %251 : vector<8x128xf32>
      %254 = arith.mulf %250, %253 : vector<8x128xf32>
      %255 = arith.cmpf oeq, %254, %254 : vector<8x128xf32>
      %256 = arith.select %255, %254, %250 : vector<8x128xi1>, vector<8x128xf32>
      %257 = arith.mulf %244, %256 : vector<8x128xf32>
      %258 = math.absf %257 : vector<8x128xf32>
      %cst_80 = arith.constant 2.41421366 : f32
      %259 = vector.broadcast %cst_80 : f32 to vector<8x128xf32>
      %260 = arith.cmpf ogt, %258, %259 : vector<8x128xf32>
      %cst_81 = arith.constant 0.414213568 : f32
      %261 = vector.broadcast %cst_81 : f32 to vector<8x128xf32>
      %262 = arith.cmpf ogt, %258, %261 : vector<8x128xf32>
      %cst_82 = arith.constant 1.000000e+00 : f32
      %263 = vector.broadcast %cst_82 : f32 to vector<8x128xf32>
      %264 = arith.addf %258, %263 : vector<8x128xf32>
      %265 = arith.select %260, %258, %264 : vector<8x128xi1>, vector<8x128xf32>
      %266 = tpu.reciprocal %265 {approx = true} : vector<8x128xf32> -> vector<8x128xf32>
      %267 = arith.mulf %265, %266 : vector<8x128xf32>
      %cst_83 = arith.constant 2.000000e+00 : f32
      %268 = vector.broadcast %cst_83 : f32 to vector<8x128xf32>
      %269 = arith.subf %268, %267 : vector<8x128xf32>
      %270 = arith.mulf %266, %269 : vector<8x128xf32>
      %271 = arith.cmpf oeq, %270, %270 : vector<8x128xf32>
      %272 = arith.select %271, %270, %266 : vector<8x128xi1>, vector<8x128xf32>
      %cst_84 = arith.constant 0.000000e+00 : f32
      %273 = vector.broadcast %cst_84 : f32 to vector<8x128xf32>
      %274 = arith.subf %273, %272 : vector<8x128xf32>
      %cst_85 = arith.constant 1.000000e+00 : f32
      %275 = vector.broadcast %cst_85 : f32 to vector<8x128xf32>
      %276 = arith.subf %258, %275 : vector<8x128xf32>
      %277 = arith.mulf %276, %272 : vector<8x128xf32>
      %278 = arith.select %262, %277, %258 : vector<8x128xi1>, vector<8x128xf32>
      %279 = arith.select %260, %274, %278 : vector<8x128xi1>, vector<8x128xf32>
      %cst_86 = arith.constant 0.785398185 : f32
      %cst_87 = arith.constant 0.000000e+00 : f32
      %280 = vector.broadcast %cst_86 : f32 to vector<8x128xf32>
      %281 = vector.broadcast %cst_87 : f32 to vector<8x128xf32>
      %282 = arith.select %262, %280, %281 : vector<8x128xi1>, vector<8x128xf32>
      %cst_88 = arith.constant 1.57079637 : f32
      %283 = vector.broadcast %cst_88 : f32 to vector<8x128xf32>
      %284 = arith.select %260, %283, %282 : vector<8x128xi1>, vector<8x128xf32>
      %285 = arith.mulf %279, %279 : vector<8x128xf32>
      %cst_89 = arith.constant 0.0805374458 : f32
      %286 = vector.broadcast %cst_89 : f32 to vector<8x128xf32>
      %287 = arith.mulf %286, %285 : vector<8x128xf32>
      %cst_90 = arith.constant 0.138776854 : f32
      %288 = vector.broadcast %cst_90 : f32 to vector<8x128xf32>
      %289 = arith.subf %287, %288 : vector<8x128xf32>
      %290 = arith.mulf %289, %285 : vector<8x128xf32>
      %cst_91 = arith.constant 0.199777111 : f32
      %291 = vector.broadcast %cst_91 : f32 to vector<8x128xf32>
      %292 = arith.addf %290, %291 : vector<8x128xf32>
      %293 = arith.mulf %292, %285 : vector<8x128xf32>
      %cst_92 = arith.constant 0.333329499 : f32
      %294 = vector.broadcast %cst_92 : f32 to vector<8x128xf32>
      %295 = arith.subf %293, %294 : vector<8x128xf32>
      %296 = arith.mulf %295, %285 : vector<8x128xf32>
      %297 = arith.mulf %296, %279 : vector<8x128xf32>
      %298 = arith.addf %297, %279 : vector<8x128xf32>
      %299 = arith.addf %284, %298 : vector<8x128xf32>
      %300 = tpu.bitcast %257 : vector<8x128xf32> -> vector<8x128xi32>
      %c-2147483648_i32_93 = arith.constant -2147483648 : i32
      %301 = vector.broadcast %c-2147483648_i32_93 : i32 to vector<8x128xi32>
      %302 = arith.andi %300, %301 : vector<8x128xi32>
      %303 = tpu.bitcast %299 : vector<8x128xf32> -> vector<8x128xi32>
      %304 = arith.xori %303, %302 : vector<8x128xi32>
      %305 = tpu.bitcast %304 : vector<8x128xi32> -> vector<8x128xf32>
      %c1_i32_94 = arith.constant 1 : i32
      %306 = tpu.dynamic_rotate %220 by %c1_i32_94 dim 1 : vector<8x128xf32>, i32 -> vector<8x128xf32>
      %c1_i32_95 = arith.constant 1 : i32
      %307 = tpu.dynamic_rotate %220 by %c1_i32_95 dim 0 : vector<8x128xf32>, i32 -> vector<8x128xf32>
      %308 = vector.shape_cast %214 : vector<1x128xf32> to vector<1x128xf32>
      %309 = vector.broadcast %308 : vector<1x128xf32> to vector<8x128xf32>
      %310 = arith.select %36, %309, %307 : vector<8x128xi1>, vector<8x128xf32>
      %311 = arith.subf %220, %306 : vector<8x128xf32>
      %312 = arith.subf %220, %310 : vector<8x128xf32>
      %313 = arith.mulf %311, %311 : vector<8x128xf32>
      %314 = arith.mulf %312, %312 : vector<8x128xf32>
      %315 = arith.addf %313, %314 : vector<8x128xf32>
      %cst_96 = arith.constant 9.99999997E-7 : f32
      %316 = vector.broadcast %cst_96 : f32 to vector<8x128xf32>
      %317 = arith.addf %311, %316 : vector<8x128xf32>
      %318 = tpu.reciprocal %317 {approx = true} : vector<8x128xf32> -> vector<8x128xf32>
      %319 = arith.mulf %317, %318 : vector<8x128xf32>
      %cst_97 = arith.constant 2.000000e+00 : f32
      %320 = vector.broadcast %cst_97 : f32 to vector<8x128xf32>
      %321 = arith.subf %320, %319 : vector<8x128xf32>
      %322 = arith.mulf %318, %321 : vector<8x128xf32>
      %323 = arith.cmpf oeq, %322, %322 : vector<8x128xf32>
      %324 = arith.select %323, %322, %318 : vector<8x128xi1>, vector<8x128xf32>
      %325 = arith.mulf %312, %324 : vector<8x128xf32>
      %326 = math.absf %325 : vector<8x128xf32>
      %cst_98 = arith.constant 2.41421366 : f32
      %327 = vector.broadcast %cst_98 : f32 to vector<8x128xf32>
      %328 = arith.cmpf ogt, %326, %327 : vector<8x128xf32>
      %cst_99 = arith.constant 0.414213568 : f32
      %329 = vector.broadcast %cst_99 : f32 to vector<8x128xf32>
      %330 = arith.cmpf ogt, %326, %329 : vector<8x128xf32>
      %cst_100 = arith.constant 1.000000e+00 : f32
      %331 = vector.broadcast %cst_100 : f32 to vector<8x128xf32>
      %332 = arith.addf %326, %331 : vector<8x128xf32>
      %333 = arith.select %328, %326, %332 : vector<8x128xi1>, vector<8x128xf32>
      %334 = tpu.reciprocal %333 {approx = true} : vector<8x128xf32> -> vector<8x128xf32>
      %335 = arith.mulf %333, %334 : vector<8x128xf32>
      %cst_101 = arith.constant 2.000000e+00 : f32
      %336 = vector.broadcast %cst_101 : f32 to vector<8x128xf32>
      %337 = arith.subf %336, %335 : vector<8x128xf32>
      %338 = arith.mulf %334, %337 : vector<8x128xf32>
      %339 = arith.cmpf oeq, %338, %338 : vector<8x128xf32>
      %340 = arith.select %339, %338, %334 : vector<8x128xi1>, vector<8x128xf32>
      %cst_102 = arith.constant 0.000000e+00 : f32
      %341 = vector.broadcast %cst_102 : f32 to vector<8x128xf32>
      %342 = arith.subf %341, %340 : vector<8x128xf32>
      %cst_103 = arith.constant 1.000000e+00 : f32
      %343 = vector.broadcast %cst_103 : f32 to vector<8x128xf32>
      %344 = arith.subf %326, %343 : vector<8x128xf32>
      %345 = arith.mulf %344, %340 : vector<8x128xf32>
      %346 = arith.select %330, %345, %326 : vector<8x128xi1>, vector<8x128xf32>
      %347 = arith.select %328, %342, %346 : vector<8x128xi1>, vector<8x128xf32>
      %cst_104 = arith.constant 0.785398185 : f32
      %cst_105 = arith.constant 0.000000e+00 : f32
      %348 = vector.broadcast %cst_104 : f32 to vector<8x128xf32>
      %349 = vector.broadcast %cst_105 : f32 to vector<8x128xf32>
      %350 = arith.select %330, %348, %349 : vector<8x128xi1>, vector<8x128xf32>
      %cst_106 = arith.constant 1.57079637 : f32
      %351 = vector.broadcast %cst_106 : f32 to vector<8x128xf32>
      %352 = arith.select %328, %351, %350 : vector<8x128xi1>, vector<8x128xf32>
      %353 = arith.mulf %347, %347 : vector<8x128xf32>
      %cst_107 = arith.constant 0.0805374458 : f32
      %354 = vector.broadcast %cst_107 : f32 to vector<8x128xf32>
      %355 = arith.mulf %354, %353 : vector<8x128xf32>
      %cst_108 = arith.constant 0.138776854 : f32
      %356 = vector.broadcast %cst_108 : f32 to vector<8x128xf32>
      %357 = arith.subf %355, %356 : vector<8x128xf32>
      %358 = arith.mulf %357, %353 : vector<8x128xf32>
      %cst_109 = arith.constant 0.199777111 : f32
      %359 = vector.broadcast %cst_109 : f32 to vector<8x128xf32>
      %360 = arith.addf %358, %359 : vector<8x128xf32>
      %361 = arith.mulf %360, %353 : vector<8x128xf32>
      %cst_110 = arith.constant 0.333329499 : f32
      %362 = vector.broadcast %cst_110 : f32 to vector<8x128xf32>
      %363 = arith.subf %361, %362 : vector<8x128xf32>
      %364 = arith.mulf %363, %353 : vector<8x128xf32>
      %365 = arith.mulf %364, %347 : vector<8x128xf32>
      %366 = arith.addf %365, %347 : vector<8x128xf32>
      %367 = arith.addf %352, %366 : vector<8x128xf32>
      %368 = tpu.bitcast %325 : vector<8x128xf32> -> vector<8x128xi32>
      %c-2147483648_i32_111 = arith.constant -2147483648 : i32
      %369 = vector.broadcast %c-2147483648_i32_111 : i32 to vector<8x128xi32>
      %370 = arith.andi %368, %369 : vector<8x128xi32>
      %371 = tpu.bitcast %367 : vector<8x128xf32> -> vector<8x128xi32>
      %372 = arith.xori %371, %370 : vector<8x128xi32>
      %373 = tpu.bitcast %372 : vector<8x128xi32> -> vector<8x128xf32>
      %374 = vector.broadcast %228 : vector<8x1xi1> to vector<8x128xi1>
      %375 = arith.andi %374, %33 : vector<8x128xi1>
      %376 = arith.subf %315, %247 : vector<8x128xf32>
      %377 = math.absf %376 : vector<8x128xf32>
      %cst_112 = arith.constant 0.000000e+00 : f32
      %378 = vector.broadcast %cst_112 : f32 to vector<8x128xf32>
      %379 = arith.select %375, %377, %378 : vector<8x128xi1>, vector<8x128xf32>
      %380 = arith.addf %207, %379 : vector<8x128xf32>
      %381 = arith.subf %373, %305 : vector<8x128xf32>
      %382 = math.absf %381 : vector<8x128xf32>
      %cst_113 = arith.constant 0.000000e+00 : f32
      %383 = vector.broadcast %cst_113 : f32 to vector<8x128xf32>
      %384 = arith.select %375, %382, %383 : vector<8x128xi1>, vector<8x128xf32>
      %385 = arith.addf %212, %384 : vector<8x128xf32>
      %386 = vector.extract_strided_slice %216 {offsets = [7, 0], sizes = [1, 128], strides = [1, 1]} : vector<8x128xf32> to vector<1x128xf32>
      %387 = vector.extract_strided_slice %220 {offsets = [7, 0], sizes = [1, 128], strides = [1, 1]} : vector<8x128xf32> to vector<1x128xf32>
      %c16 = arith.constant 16 : index
      %c0_114 = arith.constant 0 : index
      %388 = vector.load %arg2[%c16, %c0_114] : memref<32x128xf32, #tpu.memory_space<vmem>>, vector<8x128xf32>
      %c16_115 = arith.constant 16 : index
      %c0_116 = arith.constant 0 : index
      %389 = vector.load %arg3[%c16_115, %c0_116] : memref<32x128xf32, #tpu.memory_space<vmem>>, vector<8x128xf32>
      %390 = vector.broadcast %26 : vector<1x1xf32> to vector<8x128xf32>
      %391 = arith.mulf %390, %388 : vector<8x128xf32>
      %392 = vector.broadcast %27 : vector<1x1xf32> to vector<8x128xf32>
      %393 = arith.addf %391, %392 : vector<8x128xf32>
      %c16_i32_117 = arith.constant 16 : i32
      %394 = arith.addi %38, %c16_i32_117 : i32
      %395 = vector.broadcast %394 : i32 to vector<8x1xi32>
      %396 = arith.addi %37, %395 : vector<8x1xi32>
      %c16_i32_118 = arith.constant 16 : i32
      %397 = vector.broadcast %c16_i32_118 : i32 to vector<8x1xi32>
      %398 = arith.cmpi slt, %396, %397 : vector<8x1xi32>
      %c1_i32_119 = arith.constant 1 : i32
      %399 = vector.broadcast %c1_i32_119 : i32 to vector<8x1xi32>
      %400 = arith.cmpi sge, %396, %399 : vector<8x1xi32>
      %401 = arith.andi %400, %398 : vector<8x1xi1>
      %402 = arith.subf %393, %389 : vector<8x128xf32>
      %403 = math.absf %402 : vector<8x128xf32>
      %cst_120 = arith.constant 0.000000e+00 : f32
      %404 = vector.broadcast %cst_120 : f32 to vector<8x128xf32>
      %405 = arith.select %32, %403, %404 : vector<8x128xi1>, vector<8x128xf32>
      %cst_121 = arith.constant 0.000000e+00 : f32
      %406 = vector.shape_cast %398 : vector<8x1xi1> to vector<8x1xi1>
      %407 = vector.broadcast %406 : vector<8x1xi1> to vector<8x128xi1>
      %408 = vector.broadcast %cst_121 : f32 to vector<8x128xf32>
      %409 = arith.select %407, %405, %408 : vector<8x128xi1>, vector<8x128xf32>
      %410 = arith.addf %237, %409 : vector<8x128xf32>
      %c1_i32_122 = arith.constant 1 : i32
      %411 = tpu.dynamic_rotate %389 by %c1_i32_122 dim 1 : vector<8x128xf32>, i32 -> vector<8x128xf32>
      %c1_i32_123 = arith.constant 1 : i32
      %412 = tpu.dynamic_rotate %389 by %c1_i32_123 dim 0 : vector<8x128xf32>, i32 -> vector<8x128xf32>
      %413 = vector.shape_cast %386 : vector<1x128xf32> to vector<1x128xf32>
      %414 = vector.broadcast %413 : vector<1x128xf32> to vector<8x128xf32>
      %415 = arith.select %36, %414, %412 : vector<8x128xi1>, vector<8x128xf32>
      %416 = arith.subf %389, %411 : vector<8x128xf32>
      %417 = arith.subf %389, %415 : vector<8x128xf32>
      %418 = arith.mulf %416, %416 : vector<8x128xf32>
      %419 = arith.mulf %417, %417 : vector<8x128xf32>
      %420 = arith.addf %418, %419 : vector<8x128xf32>
      %cst_124 = arith.constant 9.99999997E-7 : f32
      %421 = vector.broadcast %cst_124 : f32 to vector<8x128xf32>
      %422 = arith.addf %416, %421 : vector<8x128xf32>
      %423 = tpu.reciprocal %422 {approx = true} : vector<8x128xf32> -> vector<8x128xf32>
      %424 = arith.mulf %422, %423 : vector<8x128xf32>
      %cst_125 = arith.constant 2.000000e+00 : f32
      %425 = vector.broadcast %cst_125 : f32 to vector<8x128xf32>
      %426 = arith.subf %425, %424 : vector<8x128xf32>
      %427 = arith.mulf %423, %426 : vector<8x128xf32>
      %428 = arith.cmpf oeq, %427, %427 : vector<8x128xf32>
      %429 = arith.select %428, %427, %423 : vector<8x128xi1>, vector<8x128xf32>
      %430 = arith.mulf %417, %429 : vector<8x128xf32>
      %431 = math.absf %430 : vector<8x128xf32>
      %cst_126 = arith.constant 2.41421366 : f32
      %432 = vector.broadcast %cst_126 : f32 to vector<8x128xf32>
      %433 = arith.cmpf ogt, %431, %432 : vector<8x128xf32>
      %cst_127 = arith.constant 0.414213568 : f32
      %434 = vector.broadcast %cst_127 : f32 to vector<8x128xf32>
      %435 = arith.cmpf ogt, %431, %434 : vector<8x128xf32>
      %cst_128 = arith.constant 1.000000e+00 : f32
      %436 = vector.broadcast %cst_128 : f32 to vector<8x128xf32>
      %437 = arith.addf %431, %436 : vector<8x128xf32>
      %438 = arith.select %433, %431, %437 : vector<8x128xi1>, vector<8x128xf32>
      %439 = tpu.reciprocal %438 {approx = true} : vector<8x128xf32> -> vector<8x128xf32>
      %440 = arith.mulf %438, %439 : vector<8x128xf32>
      %cst_129 = arith.constant 2.000000e+00 : f32
      %441 = vector.broadcast %cst_129 : f32 to vector<8x128xf32>
      %442 = arith.subf %441, %440 : vector<8x128xf32>
      %443 = arith.mulf %439, %442 : vector<8x128xf32>
      %444 = arith.cmpf oeq, %443, %443 : vector<8x128xf32>
      %445 = arith.select %444, %443, %439 : vector<8x128xi1>, vector<8x128xf32>
      %cst_130 = arith.constant 0.000000e+00 : f32
      %446 = vector.broadcast %cst_130 : f32 to vector<8x128xf32>
      %447 = arith.subf %446, %445 : vector<8x128xf32>
      %cst_131 = arith.constant 1.000000e+00 : f32
      %448 = vector.broadcast %cst_131 : f32 to vector<8x128xf32>
      %449 = arith.subf %431, %448 : vector<8x128xf32>
      %450 = arith.mulf %449, %445 : vector<8x128xf32>
      %451 = arith.select %435, %450, %431 : vector<8x128xi1>, vector<8x128xf32>
      %452 = arith.select %433, %447, %451 : vector<8x128xi1>, vector<8x128xf32>
      %cst_132 = arith.constant 0.785398185 : f32
      %cst_133 = arith.constant 0.000000e+00 : f32
      %453 = vector.broadcast %cst_132 : f32 to vector<8x128xf32>
      %454 = vector.broadcast %cst_133 : f32 to vector<8x128xf32>
      %455 = arith.select %435, %453, %454 : vector<8x128xi1>, vector<8x128xf32>
      %cst_134 = arith.constant 1.57079637 : f32
      %456 = vector.broadcast %cst_134 : f32 to vector<8x128xf32>
      %457 = arith.select %433, %456, %455 : vector<8x128xi1>, vector<8x128xf32>
      %458 = arith.mulf %452, %452 : vector<8x128xf32>
      %cst_135 = arith.constant 0.0805374458 : f32
      %459 = vector.broadcast %cst_135 : f32 to vector<8x128xf32>
      %460 = arith.mulf %459, %458 : vector<8x128xf32>
      %cst_136 = arith.constant 0.138776854 : f32
      %461 = vector.broadcast %cst_136 : f32 to vector<8x128xf32>
      %462 = arith.subf %460, %461 : vector<8x128xf32>
      %463 = arith.mulf %462, %458 : vector<8x128xf32>
      %cst_137 = arith.constant 0.199777111 : f32
      %464 = vector.broadcast %cst_137 : f32 to vector<8x128xf32>
      %465 = arith.addf %463, %464 : vector<8x128xf32>
      %466 = arith.mulf %465, %458 : vector<8x128xf32>
      %cst_138 = arith.constant 0.333329499 : f32
      %467 = vector.broadcast %cst_138 : f32 to vector<8x128xf32>
      %468 = arith.subf %466, %467 : vector<8x128xf32>
      %469 = arith.mulf %468, %458 : vector<8x128xf32>
      %470 = arith.mulf %469, %452 : vector<8x128xf32>
      %471 = arith.addf %470, %452 : vector<8x128xf32>
      %472 = arith.addf %457, %471 : vector<8x128xf32>
      %473 = tpu.bitcast %430 : vector<8x128xf32> -> vector<8x128xi32>
      %c-2147483648_i32_139 = arith.constant -2147483648 : i32
      %474 = vector.broadcast %c-2147483648_i32_139 : i32 to vector<8x128xi32>
      %475 = arith.andi %473, %474 : vector<8x128xi32>
      %476 = tpu.bitcast %472 : vector<8x128xf32> -> vector<8x128xi32>
      %477 = arith.xori %476, %475 : vector<8x128xi32>
      %478 = tpu.bitcast %477 : vector<8x128xi32> -> vector<8x128xf32>
      %c1_i32_140 = arith.constant 1 : i32
      %479 = tpu.dynamic_rotate %393 by %c1_i32_140 dim 1 : vector<8x128xf32>, i32 -> vector<8x128xf32>
      %c1_i32_141 = arith.constant 1 : i32
      %480 = tpu.dynamic_rotate %393 by %c1_i32_141 dim 0 : vector<8x128xf32>, i32 -> vector<8x128xf32>
      %481 = vector.shape_cast %387 : vector<1x128xf32> to vector<1x128xf32>
      %482 = vector.broadcast %481 : vector<1x128xf32> to vector<8x128xf32>
      %483 = arith.select %36, %482, %480 : vector<8x128xi1>, vector<8x128xf32>
      %484 = arith.subf %393, %479 : vector<8x128xf32>
      %485 = arith.subf %393, %483 : vector<8x128xf32>
      %486 = arith.mulf %484, %484 : vector<8x128xf32>
      %487 = arith.mulf %485, %485 : vector<8x128xf32>
      %488 = arith.addf %486, %487 : vector<8x128xf32>
      %cst_142 = arith.constant 9.99999997E-7 : f32
      %489 = vector.broadcast %cst_142 : f32 to vector<8x128xf32>
      %490 = arith.addf %484, %489 : vector<8x128xf32>
      %491 = tpu.reciprocal %490 {approx = true} : vector<8x128xf32> -> vector<8x128xf32>
      %492 = arith.mulf %490, %491 : vector<8x128xf32>
      %cst_143 = arith.constant 2.000000e+00 : f32
      %493 = vector.broadcast %cst_143 : f32 to vector<8x128xf32>
      %494 = arith.subf %493, %492 : vector<8x128xf32>
      %495 = arith.mulf %491, %494 : vector<8x128xf32>
      %496 = arith.cmpf oeq, %495, %495 : vector<8x128xf32>
      %497 = arith.select %496, %495, %491 : vector<8x128xi1>, vector<8x128xf32>
      %498 = arith.mulf %485, %497 : vector<8x128xf32>
      %499 = math.absf %498 : vector<8x128xf32>
      %cst_144 = arith.constant 2.41421366 : f32
      %500 = vector.broadcast %cst_144 : f32 to vector<8x128xf32>
      %501 = arith.cmpf ogt, %499, %500 : vector<8x128xf32>
      %cst_145 = arith.constant 0.414213568 : f32
      %502 = vector.broadcast %cst_145 : f32 to vector<8x128xf32>
      %503 = arith.cmpf ogt, %499, %502 : vector<8x128xf32>
      %cst_146 = arith.constant 1.000000e+00 : f32
      %504 = vector.broadcast %cst_146 : f32 to vector<8x128xf32>
      %505 = arith.addf %499, %504 : vector<8x128xf32>
      %506 = arith.select %501, %499, %505 : vector<8x128xi1>, vector<8x128xf32>
      %507 = tpu.reciprocal %506 {approx = true} : vector<8x128xf32> -> vector<8x128xf32>
      %508 = arith.mulf %506, %507 : vector<8x128xf32>
      %cst_147 = arith.constant 2.000000e+00 : f32
      %509 = vector.broadcast %cst_147 : f32 to vector<8x128xf32>
      %510 = arith.subf %509, %508 : vector<8x128xf32>
      %511 = arith.mulf %507, %510 : vector<8x128xf32>
      %512 = arith.cmpf oeq, %511, %511 : vector<8x128xf32>
      %513 = arith.select %512, %511, %507 : vector<8x128xi1>, vector<8x128xf32>
      %cst_148 = arith.constant 0.000000e+00 : f32
      %514 = vector.broadcast %cst_148 : f32 to vector<8x128xf32>
      %515 = arith.subf %514, %513 : vector<8x128xf32>
      %cst_149 = arith.constant 1.000000e+00 : f32
      %516 = vector.broadcast %cst_149 : f32 to vector<8x128xf32>
      %517 = arith.subf %499, %516 : vector<8x128xf32>
      %518 = arith.mulf %517, %513 : vector<8x128xf32>
      %519 = arith.select %503, %518, %499 : vector<8x128xi1>, vector<8x128xf32>
      %520 = arith.select %501, %515, %519 : vector<8x128xi1>, vector<8x128xf32>
      %cst_150 = arith.constant 0.785398185 : f32
      %cst_151 = arith.constant 0.000000e+00 : f32
      %521 = vector.broadcast %cst_150 : f32 to vector<8x128xf32>
      %522 = vector.broadcast %cst_151 : f32 to vector<8x128xf32>
      %523 = arith.select %503, %521, %522 : vector<8x128xi1>, vector<8x128xf32>
      %cst_152 = arith.constant 1.57079637 : f32
      %524 = vector.broadcast %cst_152 : f32 to vector<8x128xf32>
      %525 = arith.select %501, %524, %523 : vector<8x128xi1>, vector<8x128xf32>
      %526 = arith.mulf %520, %520 : vector<8x128xf32>
      %cst_153 = arith.constant 0.0805374458 : f32
      %527 = vector.broadcast %cst_153 : f32 to vector<8x128xf32>
      %528 = arith.mulf %527, %526 : vector<8x128xf32>
      %cst_154 = arith.constant 0.138776854 : f32
      %529 = vector.broadcast %cst_154 : f32 to vector<8x128xf32>
      %530 = arith.subf %528, %529 : vector<8x128xf32>
      %531 = arith.mulf %530, %526 : vector<8x128xf32>
      %cst_155 = arith.constant 0.199777111 : f32
      %532 = vector.broadcast %cst_155 : f32 to vector<8x128xf32>
      %533 = arith.addf %531, %532 : vector<8x128xf32>
      %534 = arith.mulf %533, %526 : vector<8x128xf32>
      %cst_156 = arith.constant 0.333329499 : f32
      %535 = vector.broadcast %cst_156 : f32 to vector<8x128xf32>
      %536 = arith.subf %534, %535 : vector<8x128xf32>
      %537 = arith.mulf %536, %526 : vector<8x128xf32>
      %538 = arith.mulf %537, %520 : vector<8x128xf32>
      %539 = arith.addf %538, %520 : vector<8x128xf32>
      %540 = arith.addf %525, %539 : vector<8x128xf32>
      %541 = tpu.bitcast %498 : vector<8x128xf32> -> vector<8x128xi32>
      %c-2147483648_i32_157 = arith.constant -2147483648 : i32
      %542 = vector.broadcast %c-2147483648_i32_157 : i32 to vector<8x128xi32>
      %543 = arith.andi %541, %542 : vector<8x128xi32>
      %544 = tpu.bitcast %540 : vector<8x128xf32> -> vector<8x128xi32>
      %545 = arith.xori %544, %543 : vector<8x128xi32>
      %546 = tpu.bitcast %545 : vector<8x128xi32> -> vector<8x128xf32>
      %547 = vector.broadcast %401 : vector<8x1xi1> to vector<8x128xi1>
      %548 = arith.andi %547, %33 : vector<8x128xi1>
      %549 = arith.subf %488, %420 : vector<8x128xf32>
      %550 = math.absf %549 : vector<8x128xf32>
      %cst_158 = arith.constant 0.000000e+00 : f32
      %551 = vector.broadcast %cst_158 : f32 to vector<8x128xf32>
      %552 = arith.select %548, %550, %551 : vector<8x128xi1>, vector<8x128xf32>
      %553 = arith.addf %380, %552 : vector<8x128xf32>
      %554 = arith.subf %546, %478 : vector<8x128xf32>
      %555 = math.absf %554 : vector<8x128xf32>
      %cst_159 = arith.constant 0.000000e+00 : f32
      %556 = vector.broadcast %cst_159 : f32 to vector<8x128xf32>
      %557 = arith.select %548, %555, %556 : vector<8x128xi1>, vector<8x128xf32>
      %558 = arith.addf %385, %557 : vector<8x128xf32>
      %559 = vector.extract_strided_slice %389 {offsets = [7, 0], sizes = [1, 128], strides = [1, 1]} : vector<8x128xf32> to vector<1x128xf32>
      %560 = vector.extract_strided_slice %393 {offsets = [7, 0], sizes = [1, 128], strides = [1, 1]} : vector<8x128xf32> to vector<1x128xf32>
      %c24 = arith.constant 24 : index
      %c0_160 = arith.constant 0 : index
      %561 = vector.load %arg2[%c24, %c0_160] : memref<32x128xf32, #tpu.memory_space<vmem>>, vector<8x128xf32>
      %c24_161 = arith.constant 24 : index
      %c0_162 = arith.constant 0 : index
      %562 = vector.load %arg3[%c24_161, %c0_162] : memref<32x128xf32, #tpu.memory_space<vmem>>, vector<8x128xf32>
      %563 = vector.broadcast %26 : vector<1x1xf32> to vector<8x128xf32>
      %564 = arith.mulf %563, %561 : vector<8x128xf32>
      %565 = vector.broadcast %27 : vector<1x1xf32> to vector<8x128xf32>
      %566 = arith.addf %564, %565 : vector<8x128xf32>
      %c24_i32 = arith.constant 24 : i32
      %567 = arith.addi %38, %c24_i32 : i32
      %568 = vector.broadcast %567 : i32 to vector<8x1xi32>
      %569 = arith.addi %37, %568 : vector<8x1xi32>
      %c16_i32_163 = arith.constant 16 : i32
      %570 = vector.broadcast %c16_i32_163 : i32 to vector<8x1xi32>
      %571 = arith.cmpi slt, %569, %570 : vector<8x1xi32>
      %c1_i32_164 = arith.constant 1 : i32
      %572 = vector.broadcast %c1_i32_164 : i32 to vector<8x1xi32>
      %573 = arith.cmpi sge, %569, %572 : vector<8x1xi32>
      %574 = arith.andi %573, %571 : vector<8x1xi1>
      %575 = arith.subf %566, %562 : vector<8x128xf32>
      %576 = math.absf %575 : vector<8x128xf32>
      %cst_165 = arith.constant 0.000000e+00 : f32
      %577 = vector.broadcast %cst_165 : f32 to vector<8x128xf32>
      %578 = arith.select %32, %576, %577 : vector<8x128xi1>, vector<8x128xf32>
      %cst_166 = arith.constant 0.000000e+00 : f32
      %579 = vector.shape_cast %571 : vector<8x1xi1> to vector<8x1xi1>
      %580 = vector.broadcast %579 : vector<8x1xi1> to vector<8x128xi1>
      %581 = vector.broadcast %cst_166 : f32 to vector<8x128xf32>
      %582 = arith.select %580, %578, %581 : vector<8x128xi1>, vector<8x128xf32>
      %583 = arith.addf %410, %582 : vector<8x128xf32>
      %c1_i32_167 = arith.constant 1 : i32
      %584 = tpu.dynamic_rotate %562 by %c1_i32_167 dim 1 : vector<8x128xf32>, i32 -> vector<8x128xf32>
      %c1_i32_168 = arith.constant 1 : i32
      %585 = tpu.dynamic_rotate %562 by %c1_i32_168 dim 0 : vector<8x128xf32>, i32 -> vector<8x128xf32>
      %586 = vector.shape_cast %559 : vector<1x128xf32> to vector<1x128xf32>
      %587 = vector.broadcast %586 : vector<1x128xf32> to vector<8x128xf32>
      %588 = arith.select %36, %587, %585 : vector<8x128xi1>, vector<8x128xf32>
      %589 = arith.subf %562, %584 : vector<8x128xf32>
      %590 = arith.subf %562, %588 : vector<8x128xf32>
      %591 = arith.mulf %589, %589 : vector<8x128xf32>
      %592 = arith.mulf %590, %590 : vector<8x128xf32>
      %593 = arith.addf %591, %592 : vector<8x128xf32>
      %cst_169 = arith.constant 9.99999997E-7 : f32
      %594 = vector.broadcast %cst_169 : f32 to vector<8x128xf32>
      %595 = arith.addf %589, %594 : vector<8x128xf32>
      %596 = tpu.reciprocal %595 {approx = true} : vector<8x128xf32> -> vector<8x128xf32>
      %597 = arith.mulf %595, %596 : vector<8x128xf32>
      %cst_170 = arith.constant 2.000000e+00 : f32
      %598 = vector.broadcast %cst_170 : f32 to vector<8x128xf32>
      %599 = arith.subf %598, %597 : vector<8x128xf32>
      %600 = arith.mulf %596, %599 : vector<8x128xf32>
      %601 = arith.cmpf oeq, %600, %600 : vector<8x128xf32>
      %602 = arith.select %601, %600, %596 : vector<8x128xi1>, vector<8x128xf32>
      %603 = arith.mulf %590, %602 : vector<8x128xf32>
      %604 = math.absf %603 : vector<8x128xf32>
      %cst_171 = arith.constant 2.41421366 : f32
      %605 = vector.broadcast %cst_171 : f32 to vector<8x128xf32>
      %606 = arith.cmpf ogt, %604, %605 : vector<8x128xf32>
      %cst_172 = arith.constant 0.414213568 : f32
      %607 = vector.broadcast %cst_172 : f32 to vector<8x128xf32>
      %608 = arith.cmpf ogt, %604, %607 : vector<8x128xf32>
      %cst_173 = arith.constant 1.000000e+00 : f32
      %609 = vector.broadcast %cst_173 : f32 to vector<8x128xf32>
      %610 = arith.addf %604, %609 : vector<8x128xf32>
      %611 = arith.select %606, %604, %610 : vector<8x128xi1>, vector<8x128xf32>
      %612 = tpu.reciprocal %611 {approx = true} : vector<8x128xf32> -> vector<8x128xf32>
      %613 = arith.mulf %611, %612 : vector<8x128xf32>
      %cst_174 = arith.constant 2.000000e+00 : f32
      %614 = vector.broadcast %cst_174 : f32 to vector<8x128xf32>
      %615 = arith.subf %614, %613 : vector<8x128xf32>
      %616 = arith.mulf %612, %615 : vector<8x128xf32>
      %617 = arith.cmpf oeq, %616, %616 : vector<8x128xf32>
      %618 = arith.select %617, %616, %612 : vector<8x128xi1>, vector<8x128xf32>
      %cst_175 = arith.constant 0.000000e+00 : f32
      %619 = vector.broadcast %cst_175 : f32 to vector<8x128xf32>
      %620 = arith.subf %619, %618 : vector<8x128xf32>
      %cst_176 = arith.constant 1.000000e+00 : f32
      %621 = vector.broadcast %cst_176 : f32 to vector<8x128xf32>
      %622 = arith.subf %604, %621 : vector<8x128xf32>
      %623 = arith.mulf %622, %618 : vector<8x128xf32>
      %624 = arith.select %608, %623, %604 : vector<8x128xi1>, vector<8x128xf32>
      %625 = arith.select %606, %620, %624 : vector<8x128xi1>, vector<8x128xf32>
      %cst_177 = arith.constant 0.785398185 : f32
      %cst_178 = arith.constant 0.000000e+00 : f32
      %626 = vector.broadcast %cst_177 : f32 to vector<8x128xf32>
      %627 = vector.broadcast %cst_178 : f32 to vector<8x128xf32>
      %628 = arith.select %608, %626, %627 : vector<8x128xi1>, vector<8x128xf32>
      %cst_179 = arith.constant 1.57079637 : f32
      %629 = vector.broadcast %cst_179 : f32 to vector<8x128xf32>
      %630 = arith.select %606, %629, %628 : vector<8x128xi1>, vector<8x128xf32>
      %631 = arith.mulf %625, %625 : vector<8x128xf32>
      %cst_180 = arith.constant 0.0805374458 : f32
      %632 = vector.broadcast %cst_180 : f32 to vector<8x128xf32>
      %633 = arith.mulf %632, %631 : vector<8x128xf32>
      %cst_181 = arith.constant 0.138776854 : f32
      %634 = vector.broadcast %cst_181 : f32 to vector<8x128xf32>
      %635 = arith.subf %633, %634 : vector<8x128xf32>
      %636 = arith.mulf %635, %631 : vector<8x128xf32>
      %cst_182 = arith.constant 0.199777111 : f32
      %637 = vector.broadcast %cst_182 : f32 to vector<8x128xf32>
      %638 = arith.addf %636, %637 : vector<8x128xf32>
      %639 = arith.mulf %638, %631 : vector<8x128xf32>
      %cst_183 = arith.constant 0.333329499 : f32
      %640 = vector.broadcast %cst_183 : f32 to vector<8x128xf32>
      %641 = arith.subf %639, %640 : vector<8x128xf32>
      %642 = arith.mulf %641, %631 : vector<8x128xf32>
      %643 = arith.mulf %642, %625 : vector<8x128xf32>
      %644 = arith.addf %643, %625 : vector<8x128xf32>
      %645 = arith.addf %630, %644 : vector<8x128xf32>
      %646 = tpu.bitcast %603 : vector<8x128xf32> -> vector<8x128xi32>
      %c-2147483648_i32_184 = arith.constant -2147483648 : i32
      %647 = vector.broadcast %c-2147483648_i32_184 : i32 to vector<8x128xi32>
      %648 = arith.andi %646, %647 : vector<8x128xi32>
      %649 = tpu.bitcast %645 : vector<8x128xf32> -> vector<8x128xi32>
      %650 = arith.xori %649, %648 : vector<8x128xi32>
      %651 = tpu.bitcast %650 : vector<8x128xi32> -> vector<8x128xf32>
      %c1_i32_185 = arith.constant 1 : i32
      %652 = tpu.dynamic_rotate %566 by %c1_i32_185 dim 1 : vector<8x128xf32>, i32 -> vector<8x128xf32>
      %c1_i32_186 = arith.constant 1 : i32
      %653 = tpu.dynamic_rotate %566 by %c1_i32_186 dim 0 : vector<8x128xf32>, i32 -> vector<8x128xf32>
      %654 = vector.shape_cast %560 : vector<1x128xf32> to vector<1x128xf32>
      %655 = vector.broadcast %654 : vector<1x128xf32> to vector<8x128xf32>
      %656 = arith.select %36, %655, %653 : vector<8x128xi1>, vector<8x128xf32>
      %657 = arith.subf %566, %652 : vector<8x128xf32>
      %658 = arith.subf %566, %656 : vector<8x128xf32>
      %659 = arith.mulf %657, %657 : vector<8x128xf32>
      %660 = arith.mulf %658, %658 : vector<8x128xf32>
      %661 = arith.addf %659, %660 : vector<8x128xf32>
      %cst_187 = arith.constant 9.99999997E-7 : f32
      %662 = vector.broadcast %cst_187 : f32 to vector<8x128xf32>
      %663 = arith.addf %657, %662 : vector<8x128xf32>
      %664 = tpu.reciprocal %663 {approx = true} : vector<8x128xf32> -> vector<8x128xf32>
      %665 = arith.mulf %663, %664 : vector<8x128xf32>
      %cst_188 = arith.constant 2.000000e+00 : f32
      %666 = vector.broadcast %cst_188 : f32 to vector<8x128xf32>
      %667 = arith.subf %666, %665 : vector<8x128xf32>
      %668 = arith.mulf %664, %667 : vector<8x128xf32>
      %669 = arith.cmpf oeq, %668, %668 : vector<8x128xf32>
      %670 = arith.select %669, %668, %664 : vector<8x128xi1>, vector<8x128xf32>
      %671 = arith.mulf %658, %670 : vector<8x128xf32>
      %672 = math.absf %671 : vector<8x128xf32>
      %cst_189 = arith.constant 2.41421366 : f32
      %673 = vector.broadcast %cst_189 : f32 to vector<8x128xf32>
      %674 = arith.cmpf ogt, %672, %673 : vector<8x128xf32>
      %cst_190 = arith.constant 0.414213568 : f32
      %675 = vector.broadcast %cst_190 : f32 to vector<8x128xf32>
      %676 = arith.cmpf ogt, %672, %675 : vector<8x128xf32>
      %cst_191 = arith.constant 1.000000e+00 : f32
      %677 = vector.broadcast %cst_191 : f32 to vector<8x128xf32>
      %678 = arith.addf %672, %677 : vector<8x128xf32>
      %679 = arith.select %674, %672, %678 : vector<8x128xi1>, vector<8x128xf32>
      %680 = tpu.reciprocal %679 {approx = true} : vector<8x128xf32> -> vector<8x128xf32>
      %681 = arith.mulf %679, %680 : vector<8x128xf32>
      %cst_192 = arith.constant 2.000000e+00 : f32
      %682 = vector.broadcast %cst_192 : f32 to vector<8x128xf32>
      %683 = arith.subf %682, %681 : vector<8x128xf32>
      %684 = arith.mulf %680, %683 : vector<8x128xf32>
      %685 = arith.cmpf oeq, %684, %684 : vector<8x128xf32>
      %686 = arith.select %685, %684, %680 : vector<8x128xi1>, vector<8x128xf32>
      %cst_193 = arith.constant 0.000000e+00 : f32
      %687 = vector.broadcast %cst_193 : f32 to vector<8x128xf32>
      %688 = arith.subf %687, %686 : vector<8x128xf32>
      %cst_194 = arith.constant 1.000000e+00 : f32
      %689 = vector.broadcast %cst_194 : f32 to vector<8x128xf32>
      %690 = arith.subf %672, %689 : vector<8x128xf32>
      %691 = arith.mulf %690, %686 : vector<8x128xf32>
      %692 = arith.select %676, %691, %672 : vector<8x128xi1>, vector<8x128xf32>
      %693 = arith.select %674, %688, %692 : vector<8x128xi1>, vector<8x128xf32>
      %cst_195 = arith.constant 0.785398185 : f32
      %cst_196 = arith.constant 0.000000e+00 : f32
      %694 = vector.broadcast %cst_195 : f32 to vector<8x128xf32>
      %695 = vector.broadcast %cst_196 : f32 to vector<8x128xf32>
      %696 = arith.select %676, %694, %695 : vector<8x128xi1>, vector<8x128xf32>
      %cst_197 = arith.constant 1.57079637 : f32
      %697 = vector.broadcast %cst_197 : f32 to vector<8x128xf32>
      %698 = arith.select %674, %697, %696 : vector<8x128xi1>, vector<8x128xf32>
      %699 = arith.mulf %693, %693 : vector<8x128xf32>
      %cst_198 = arith.constant 0.0805374458 : f32
      %700 = vector.broadcast %cst_198 : f32 to vector<8x128xf32>
      %701 = arith.mulf %700, %699 : vector<8x128xf32>
      %cst_199 = arith.constant 0.138776854 : f32
      %702 = vector.broadcast %cst_199 : f32 to vector<8x128xf32>
      %703 = arith.subf %701, %702 : vector<8x128xf32>
      %704 = arith.mulf %703, %699 : vector<8x128xf32>
      %cst_200 = arith.constant 0.199777111 : f32
      %705 = vector.broadcast %cst_200 : f32 to vector<8x128xf32>
      %706 = arith.addf %704, %705 : vector<8x128xf32>
      %707 = arith.mulf %706, %699 : vector<8x128xf32>
      %cst_201 = arith.constant 0.333329499 : f32
      %708 = vector.broadcast %cst_201 : f32 to vector<8x128xf32>
      %709 = arith.subf %707, %708 : vector<8x128xf32>
      %710 = arith.mulf %709, %699 : vector<8x128xf32>
      %711 = arith.mulf %710, %693 : vector<8x128xf32>
      %712 = arith.addf %711, %693 : vector<8x128xf32>
      %713 = arith.addf %698, %712 : vector<8x128xf32>
      %714 = tpu.bitcast %671 : vector<8x128xf32> -> vector<8x128xi32>
      %c-2147483648_i32_202 = arith.constant -2147483648 : i32
      %715 = vector.broadcast %c-2147483648_i32_202 : i32 to vector<8x128xi32>
      %716 = arith.andi %714, %715 : vector<8x128xi32>
      %717 = tpu.bitcast %713 : vector<8x128xf32> -> vector<8x128xi32>
      %718 = arith.xori %717, %716 : vector<8x128xi32>
      %719 = tpu.bitcast %718 : vector<8x128xi32> -> vector<8x128xf32>
      %720 = vector.broadcast %574 : vector<8x1xi1> to vector<8x128xi1>
      %721 = arith.andi %720, %33 : vector<8x128xi1>
      %722 = arith.subf %661, %593 : vector<8x128xf32>
      %723 = math.absf %722 : vector<8x128xf32>
      %cst_203 = arith.constant 0.000000e+00 : f32
      %724 = vector.broadcast %cst_203 : f32 to vector<8x128xf32>
      %725 = arith.select %721, %723, %724 : vector<8x128xi1>, vector<8x128xf32>
      %726 = arith.addf %553, %725 : vector<8x128xf32>
      %727 = arith.subf %719, %651 : vector<8x128xf32>
      %728 = math.absf %727 : vector<8x128xf32>
      %cst_204 = arith.constant 0.000000e+00 : f32
      %729 = vector.broadcast %cst_204 : f32 to vector<8x128xf32>
      %730 = arith.select %721, %728, %729 : vector<8x128xi1>, vector<8x128xf32>
      %731 = arith.addf %558, %730 : vector<8x128xf32>
      %732 = vector.extract_strided_slice %562 {offsets = [7, 0], sizes = [1, 128], strides = [1, 1]} : vector<8x128xf32> to vector<1x128xf32>
      %733 = vector.extract_strided_slice %566 {offsets = [7, 0], sizes = [1, 128], strides = [1, 1]} : vector<8x128xf32> to vector<1x128xf32>
      %c0_205 = arith.constant 0 : index
      %c0_206 = arith.constant 0 : index
      %734 = vector.load %arg16[%c0_205, %c0_206] : memref<1x128xf32, #tpu.memory_space<vmem>>, vector<1x128xf32>
      tpu.vector_store %arg16[%c0_205, %c0_206], %732 {strides = array<i32>} : memref<1x128xf32, #tpu.memory_space<vmem>>, vector<1x128xf32>,
      %c0_207 = arith.constant 0 : index
      %c0_208 = arith.constant 0 : index
      %735 = vector.load %arg17[%c0_207, %c0_208] : memref<1x128xf32, #tpu.memory_space<vmem>>, vector<1x128xf32>
      tpu.vector_store %arg17[%c0_207, %c0_208], %733 {strides = array<i32>} : memref<1x128xf32, #tpu.memory_space<vmem>>, vector<1x128xf32>,
      %c0_209 = arith.constant 0 : index
      %c0_210 = arith.constant 0 : index
      %736 = vector.load %arg13[%c0_209, %c0_210] : memref<1x1xf32, #tpu.memory_space<vmem>>, vector<1x1xf32>
      %cst_211 = arith.constant dense<0.000000e+00> : vector<8xf32>
      %737 = vector.multi_reduction <add>, %583, %cst_211 [1] : vector<8x128xf32> to vector<8xf32>
      %738 = vector.shape_cast %737 : vector<8xf32> to vector<8x1xf32>
      %cst_212 = arith.constant dense<0.000000e+00> : vector<1xf32>
      %739 = vector.multi_reduction <add>, %738, %cst_212 [0] : vector<8x1xf32> to vector<1xf32>
      %740 = vector.shape_cast %739 : vector<1xf32> to vector<1x1xf32>
      %741 = arith.addf %736, %740 : vector<1x1xf32>
      %c0_213 = arith.constant 0 : index
      %c0_214 = arith.constant 0 : index
      %742 = vector.load %arg13[%c0_213, %c0_214] : memref<1x1xf32, #tpu.memory_space<vmem>>, vector<1x1xf32>
      tpu.vector_store %arg13[%c0_213, %c0_214], %741 {strides = array<i32>} : memref<1x1xf32, #tpu.memory_space<vmem>>, vector<1x1xf32>,
      %c0_215 = arith.constant 0 : index
      %c0_216 = arith.constant 0 : index
      %743 = vector.load %arg14[%c0_215, %c0_216] : memref<1x1xf32, #tpu.memory_space<vmem>>, vector<1x1xf32>
      %cst_217 = arith.constant dense<0.000000e+00> : vector<8xf32>
      %744 = vector.multi_reduction <add>, %726, %cst_217 [1] : vector<8x128xf32> to vector<8xf32>
      %745 = vector.shape_cast %744 : vector<8xf32> to vector<8x1xf32>
      %cst_218 = arith.constant dense<0.000000e+00> : vector<1xf32>
      %746 = vector.multi_reduction <add>, %745, %cst_218 [0] : vector<8x1xf32> to vector<1xf32>
      %747 = vector.shape_cast %746 : vector<1xf32> to vector<1x1xf32>
      %748 = arith.addf %743, %747 : vector<1x1xf32>
      %c0_219 = arith.constant 0 : index
      %c0_220 = arith.constant 0 : index
      %749 = vector.load %arg14[%c0_219, %c0_220] : memref<1x1xf32, #tpu.memory_space<vmem>>, vector<1x1xf32>
      tpu.vector_store %arg14[%c0_219, %c0_220], %748 {strides = array<i32>} : memref<1x1xf32, #tpu.memory_space<vmem>>, vector<1x1xf32>,
      %c0_221 = arith.constant 0 : index
      %c0_222 = arith.constant 0 : index
      %750 = vector.load %arg15[%c0_221, %c0_222] : memref<1x1xf32, #tpu.memory_space<vmem>>, vector<1x1xf32>
      %cst_223 = arith.constant dense<0.000000e+00> : vector<8xf32>
      %751 = vector.multi_reduction <add>, %731, %cst_223 [1] : vector<8x128xf32> to vector<8xf32>
      %752 = vector.shape_cast %751 : vector<8xf32> to vector<8x1xf32>
      %cst_224 = arith.constant dense<0.000000e+00> : vector<1xf32>
      %753 = vector.multi_reduction <add>, %752, %cst_224 [0] : vector<8x1xf32> to vector<1xf32>
      %754 = vector.shape_cast %753 : vector<1xf32> to vector<1x1xf32>
      %755 = arith.addf %750, %754 : vector<1x1xf32>
      %c0_225 = arith.constant 0 : index
      %c0_226 = arith.constant 0 : index
      %756 = vector.load %arg15[%c0_225, %c0_226] : memref<1x1xf32, #tpu.memory_space<vmem>>, vector<1x1xf32>
      tpu.vector_store %arg15[%c0_225, %c0_226], %755 {strides = array<i32>} : memref<1x1xf32, #tpu.memory_space<vmem>>, vector<1x1xf32>,
    } else {
    }
    %c1_i32_11 = arith.constant 1 : i32
    %21 = arith.cmpi eq, %arg0, %c1_i32_11 : i32
    %c0_i32_12 = arith.constant 0 : i32
    %22 = arith.cmpi eq, %arg1, %c0_i32_12 : i32
    %23 = arith.andi %21, %22 : i1
    %24 = arith.extui %23 : i1 to i32
    %c0_i32_13 = arith.constant 0 : i32
    %25 = arith.cmpi ne, %24, %c0_i32_13 : i32
    scf.if %25 {
      %c0 = arith.constant 0 : index
      %c0_14 = arith.constant 0 : index
      %26 = vector.load %arg13[%c0, %c0_14] : memref<1x1xf32, #tpu.memory_space<vmem>>, vector<1x1xf32>
      %cst = arith.constant 3.906250e-03 : f32
      %27 = vector.broadcast %cst : f32 to vector<1x1xf32>
      %28 = arith.mulf %26, %27 : vector<1x1xf32>
      %c0_15 = arith.constant 0 : index
      %c0_16 = arith.constant 0 : index
      %29 = vector.load %arg14[%c0_15, %c0_16] : memref<1x1xf32, #tpu.memory_space<vmem>>, vector<1x1xf32>
      %c0_17 = arith.constant 0 : index
      %c0_18 = arith.constant 0 : index
      %30 = vector.load %arg15[%c0_17, %c0_18] : memref<1x1xf32, #tpu.memory_space<vmem>>, vector<1x1xf32>
      %31 = arith.addf %29, %30 : vector<1x1xf32>
      %cst_19 = arith.constant 0.00444444455 : f32
      %32 = vector.broadcast %cst_19 : f32 to vector<1x1xf32>
      %33 = arith.mulf %31, %32 : vector<1x1xf32>
      %34 = arith.addf %28, %33 : vector<1x1xf32>
      %c0_20 = arith.constant 0 : index
      %c0_21 = arith.constant 0 : index
      %35 = vector.load %arg5[%c0_20, %c0_21] : memref<1x1xf32, #tpu.memory_space<vmem>>, vector<1x1xf32>
      tpu.vector_store %arg5[%c0_20, %c0_21], %34 {strides = array<i32>} : memref<1x1xf32, #tpu.memory_space<vmem>>, vector<1x1xf32>,
    } else {
    }
    return
  }
  func.func @transform_0(%arg0: i32, %arg1: i32) -> (i32, i32) {
    %c0_i32 = arith.constant 0 : i32
    %c0_i32_0 = arith.constant 0 : i32
    return %arg1, %c0_i32 : i32, i32
  }
  func.func @transform_1(%arg0: i32, %arg1: i32) -> (i32, i32) {
    %c0_i32 = arith.constant 0 : i32
    %c0_i32_0 = arith.constant 0 : i32
    return %arg1, %c0_i32 : i32, i32
  }
  func.func @transform_2(%arg0: i32, %arg1: i32) -> (i32, i32) {
    %c1_i32 = arith.constant 1 : i32
    %0 = arith.subi %c1_i32, %arg0 : i32
    %1 = arith.muli %arg1, %0 : i32
    %c0_i32 = arith.constant 0 : i32
    %c0_i32_0 = arith.constant 0 : i32
    return %1, %c0_i32 : i32, i32
  }
  func.func @transform_3(%arg0: i32, %arg1: i32) -> (i32, i32) {
    %c0_i32 = arith.constant 0 : i32
    %c0_i32_0 = arith.constant 0 : i32
    %c0_i32_1 = arith.constant 0 : i32
    return %c0_i32, %c0_i32_0 : i32, i32
  }
}

</mosaic_0001>

<llo_original>
// kernel: tpu_custom_call.1
$region0: #{tpu_custom_call.1}
  #allocation0 [shape = 'u32[]', space=smem, size = 0x4, offset = 0x4, fixed_abs, tag = 'smem constant byte address 0x4 - core index']
  #allocation1 [shape = 'u32[144,128]{1,0:T(1,128)}', space=vmem, size = 0x12000, scoped, tag = 'internal scratch']
  #allocation2 [shape = 'f32[8,128]{1,0:T(8,128)}', space=vmem, size = 0x1000, scoped, tag = 'scratch operand']
  #allocation3 [shape = 'f32[8,128]{1,0:T(8,128)}', space=vmem, size = 0x1000, scoped, tag = 'scratch operand']
  #allocation4 [shape = 'f32[8,128]{1,0:T(8,128)}', space=vmem, size = 0x1000, scoped, tag = 'scratch operand']
  #allocation5 [shape = 'f32[8,128]{1,0:T(8,128)}', space=vmem, size = 0x1000, scoped, tag = 'scratch operand']
  #allocation6 [shape = 'f32[8,128]{1,0:T(8,128)}', space=vmem, size = 0x1000, scoped, tag = 'scratch operand']
  #allocation7 [shape = 'f32[1,1]{1,0:T(1,128)}', space=vmem, size = 0x200, scoped, tag = 'scratch operand']
  #allocation8 [shape = 'f32[1,1]{1,0:T(1,128)}', space=vmem, size = 0x200, scoped, tag = 'scratch operand']
  #allocation9 [shape = 'f32[1,1]{1,0:T(1,128)}', space=vmem, size = 0x200, scoped, tag = 'scratch operand']
  #allocation10 [shape = 'f32[1,1]{1,0:T(1,128)}', space=vmem, size = 0x200, scoped, tag = 'scratch operand']
  #allocation11 [shape = 'f32[1,1]{1,0:T(1,128)}', space=vmem, size = 0x200, scoped, tag = 'scratch operand']
  #allocation12 [shape = 'f32[1,128]{1,0:T(1,128)}', space=vmem, size = 0x200, scoped, tag = 'scratch operand']
  #allocation13 [shape = 'f32[1,128]{1,0:T(1,128)}', space=vmem, size = 0x200, scoped, tag = 'scratch operand']
  %s0 = inlined_call_operand.hbm [shape: f32[32,128], index: 0, kind: input, shape index: {}]
  %s1 = inlined_call_operand.hbm [shape: f32[32,128], index: 1, kind: input, shape index: {}]
  %s2 = inlined_call_operand.hbm [shape: s8[32,128], index: 2, kind: input, shape index: {}]
  %s3 = inlined_call_operand.hbm [shape: f32[1,1], index: 3, kind: output, shape index: {}]
  %s4 = sld [smem:[#allocation0]]
  $region81: #{tpu_custom_call.1} parent=0
    _
  %s6 = ssub.s32 1, %s4
  %s7 = scalar_select 0, %s6, %s4
  $region1: #{tpu_custom_call.1} parent=0
    #allocation14 [shape = 'u8[16384]{0}', space=vmem, size = 0x4000, scoped, tag = 'input window, operand 0, single buffered']
    #allocation15 [shape = 's32[2]{0}', space=sflag, size = 0x8, scoped, tag = 'scoped memory for tpu_custom_call.1']
    #allocation16 [shape = 's32[2]{0}', space=sflag, size = 0x8, scoped, tag = 'scoped memory for tpu_custom_call.1']
    #allocation17 [shape = 'u8[16384]{0}', space=vmem, size = 0x4000, scoped, tag = 'input window, operand 1, single buffered']
    #allocation18 [shape = 's32[1]{0}', space=sflag, size = 0x4, scoped, tag = 'scoped memory for tpu_custom_call.1']
    #allocation19 [shape = 'u8[8192]{0}', space=vmem, size = 0x2000, scoped, tag = 'input window, operand 2']
    #allocation20 [shape = 'u8[512]{0}', space=vmem, size = 0x400, scoped, tag = 'output window, operand 0, single buffered']
    %8 = vsyncpa [#allocation15], 0
    %9 = vsyncpa [#allocation18], 0
    %10 = vsyncpa [#allocation16], 0
    loop: start=0, step=1, limit=4
    $region2: #{tpu_custom_call.1} parent=1 // loop_pre_header
      _
    $region3: #{tpu_custom_call.1} parent=1 // loop_header
      %s12 = sphi 0, %s16
      %p13 = scmp.ge.s32.totalorder %s12, 4
      %s19 = sphi 0, %s31
      %s20 = sphi 0, %s27
      %s21 = sphi 0, %s19
      %s22 = sphi 0, %s20
      %s23 = sphi 0, %s21
      %s24 = sphi 0, %s22
      %s34 = sphi 0, %s36
      %s37 = sphi 0, %s34
      %s38 = sphi 0, %s37
      %s54 = sphi 0, %s38
      %s60 = sphi 0, %s62
      %s63 = sphi 0, %s60
      %s64 = sphi 0, %s63
      %s80 = sphi 0, %s64
      %s90 = sphi 0, %s92
      %s93 = sphi 0, %s90
      %s94 = sphi 0, %s93
      %s110 = sphi 0, %s94
      %s114 = sphi 0, %s114
      %s116 = sphi 0, %s114
      %s117 = sphi 0, %s116
      %s131 = sphi 0, %s117
    $region4: #{tpu_custom_call.1} parent=1 // loop_header_branch
      %15 = sbr.rel (%p13) target = $region8
    $region5: #{tpu_custom_call.1} parent=1 // loop_body
      %s17 = ssub.s32 %s12, 1
      %s18 = ssub.s32 %s12, 2
      %s25 = sadd.s32 1, %s20
      %p26 = scmp.ge.s32.totalorder %s25, 1
      %s27 = scalar_select %p26, 0, %s25
      %s28 = sadd.s32 1, %s19
      %s29 = scalar_select %p26, %s28, %s19
      %p30 = scmp.ge.s32.totalorder %s29, 2
      %s31 = scalar_select %p30, 0, %s29
      %s32 = ssub.s32 %s20, %s27
      %p33 = scmp.eq.s32.totalorder %s32, 0
      %s35 = sadd.s32 %s34, 1
      %s36 = scalar_select %p33, %s34, %s35
      %p39 = pneg %p33
      %p40 = scmp.eq.s32.totalorder %s12, 1
      %p41 = por %p39, %p40
      %p42 = scmp.ne.s32.totalorder %s34, %s37
      %p43 = scmp.eq.s32.totalorder %s12, 0
      %p44 = por %p42, %p43
      %p45 = scmp.ne.s32.totalorder %s34, %s37
      %p46 = scmp.eq.s32.totalorder %s17, 1
      %p47 = por %p45, %p46
      %p48 = scmp.ne.s32.totalorder %s37, %s38
      %p49 = scmp.eq.s32.totalorder %s17, 0
      %p50 = por %p48, %p49
      %p51 = scmp.ne.s32.totalorder %s37, %s38
      %p52 = scmp.eq.s32.totalorder %s18, 1
      %p53 = por %p51, %p52
      %p55 = scmp.ne.s32.totalorder %s38, %s54
      %p56 = scmp.eq.s32.totalorder %s18, 0
      %p57 = por %p55, %p56
      %s58 = ssub.s32 %s20, %s27
      %p59 = scmp.eq.s32.totalorder %s58, 0
      %s61 = sadd.s32 %s60, 1
      %s62 = scalar_select %p59, %s60, %s61
      %p65 = pneg %p59
      %p66 = scmp.eq.s32.totalorder %s12, 1
      %p67 = por %p65, %p66
      %p68 = scmp.ne.s32.totalorder %s60, %s63
      %p69 = scmp.eq.s32.totalorder %s12, 0
      %p70 = por %p68, %p69
      %p71 = scmp.ne.s32.totalorder %s60, %s63
      %p72 = scmp.eq.s32.totalorder %s17, 1
      %p73 = por %p71, %p72
      %p74 = scmp.ne.s32.totalorder %s63, %s64
      %p75 = scmp.eq.s32.totalorder %s17, 0
      %p76 = por %p74, %p75
      %p77 = scmp.ne.s32.totalorder %s63, %s64
      %p78 = scmp.eq.s32.totalorder %s18, 1
      %p79 = por %p77, %p78
      %p81 = scmp.ne.s32.totalorder %s64, %s80
      %p82 = scmp.eq.s32.totalorder %s18, 0
      %p83 = por %p81, %p82
      %s84 = ssub.s32 1, %s19
      %s85 = smul.u32 %s20, %s84
      %s86 = ssub.s32 1, %s31
      %s87 = smul.u32 %s27, %s86
      %s88 = ssub.s32 %s85, %s87
      %p89 = scmp.eq.s32.totalorder %s88, 0
      %s91 = sadd.s32 %s90, 1
      %s92 = scalar_select %p89, %s90, %s91
      %p95 = pneg %p89
      %p96 = scmp.eq.s32.totalorder %s12, 1
      %p97 = por %p95, %p96
      %p98 = scmp.ne.s32.totalorder %s90, %s93
      %p99 = scmp.eq.s32.totalorder %s12, 0
      %p100 = por %p98, %p99
      %p101 = scmp.ne.s32.totalorder %s90, %s93
      %p102 = scmp.eq.s32.totalorder %s17, 1
      %p103 = por %p101, %p102
      %p104 = scmp.ne.s32.totalorder %s93, %s94
      %p105 = scmp.eq.s32.totalorder %s17, 0
      %p106 = por %p104, %p105
      %p107 = scmp.ne.s32.totalorder %s93, %s94
      %p108 = scmp.eq.s32.totalorder %s18, 1
      %p109 = por %p107, %p108
      %p111 = scmp.ne.s32.totalorder %s94, %s110
      %p112 = scmp.eq.s32.totalorder %s18, 0
      %p113 = por %p111, %p112
      %s115 = sadd.s32 %s114, 1
      %p118 = scmp.eq.s32.totalorder %s12, 1
      %p119 = scmp.ne.s32.totalorder %s114, %s116
      %p120 = scmp.eq.s32.totalorder %s12, 0
      %p121 = por %p119, %p120
      %p122 = scmp.ne.s32.totalorder %s114, %s116
      %p123 = scmp.eq.s32.totalorder %s17, 1
      %p124 = por %p122, %p123
      %p125 = scmp.ne.s32.totalorder %s116, %s117
      %p126 = scmp.eq.s32.totalorder %s17, 0
      %p127 = por %p125, %p126
      %p128 = scmp.ne.s32.totalorder %s116, %s117
      %p129 = scmp.eq.s32.totalorder %s18, 1
      %p130 = por %p128, %p129
      %p132 = scmp.ne.s32.totalorder %s117, %s131
      %p133 = scmp.eq.s32.totalorder %s18, 0
      %p134 = por %p132, %p133
      %p135 = scmp.le.s32.totalorder 1, %s12
      %p136 = scmp.lt.s32.totalorder %s12, 3
      %p137 = pnand %p135, %p136
      %p138 = pneg %p137
      // Predicated region
      $region9: #{tpu_custom_call.1} parent=5 // pred_check
        _
      $region10: #{tpu_custom_call.1} parent=5 // pred_check_branch
        %140 = sbr.rel (%p137) target = $region12
      $region11: #{tpu_custom_call.1} parent=5 // pred_region
        %s141 = ssub.s32 %s12, 1
        // Predicated region
        $region13: #{tpu_custom_call.1} parent=11 // pred_check
          %p142 = pneg %p50
        $region14: #{tpu_custom_call.1} parent=11 // pred_check_branch
          %144 = sbr.rel (%p142) target = $region16
        $region15: #{tpu_custom_call.1} parent=11 // pred_region
          %s145 = smul.u32 4, %s22
          %s147 = ssub.s32 512, 512
          %148 = vsyncadd [#allocation15], %s147
          %s149 = smul.addr %s145, 128
          %s150 = scalar_lea.hbm %s0, %s149
          %s151 = sshll.u32 [#allocation14], 4
          %s152 = int_to_ptr.vmem [resolvable:$true] %s151
          %157 = dma.hbm_to_vmem [thread:$0]  %s150, 512, %s152, [#allocation15], 128, 128, 8
        $region16: #{tpu_custom_call.1} parent=11 // pred_fallthru
          _
        // Predicated region
        $region17: #{tpu_custom_call.1} parent=11 // pred_check
          %p158 = pneg %p76
        $region18: #{tpu_custom_call.1} parent=11 // pred_check_branch
          %160 = sbr.rel (%p158) target = $region20
        $region19: #{tpu_custom_call.1} parent=11 // pred_region
          %s161 = smul.u32 4, %s22
          %s163 = ssub.s32 512, 512
          %164 = vsyncadd [#allocation18], %s163
          %s165 = smul.addr %s161, 128
          %s166 = scalar_lea.hbm %s1, %s165
          %s167 = sshll.u32 [#allocation17], 4
          %s168 = int_to_ptr.vmem [resolvable:$true] %s167
          %173 = dma.hbm_to_vmem [thread:$0]  %s166, 512, %s168, [#allocation18], 128, 128, 8
        $region20: #{tpu_custom_call.1} parent=11 // pred_fallthru
          _
      $region12: #{tpu_custom_call.1} parent=5 // pred_fallthru
        _
      %p174 = scmp.lt.s32.totalorder %s12, 2
      // Predicated region
      $region21: #{tpu_custom_call.1} parent=5 // pred_check
        %p175 = pneg %p174
      $region22: #{tpu_custom_call.1} parent=5 // pred_check_branch
        %177 = sbr.rel (%p175) target = $region24
      $region23: #{tpu_custom_call.1} parent=5 // pred_region
        // Predicated region
        $region25: #{tpu_custom_call.1} parent=23 // pred_check
          %p178 = pneg %p100
        $region26: #{tpu_custom_call.1} parent=23 // pred_check_branch
          %180 = sbr.rel (%p178) target = $region28
        $region27: #{tpu_custom_call.1} parent=23 // pred_region
          %s181 = sand.u32 %s12, 1
          %s182 = scalar_lea.sflag [#allocation15], %s181
          %s183 = sand.u32 %s90, 1
          %s184 = smul.addr %s183, 8
          %s185 = scalar_lea.vmem [#allocation19], %s184
          %s186 = ssub.s32 1, %s19
          %s187 = smul.u32 %s20, %s186
          %s189 = ssub.s32 128, 128
          %190 = vsyncadd %s182, %s189
          %s191 = smul.addr %s187, 128
          %s192 = scalar_lea.hbm %s2, %s191
          %s194 = sshll.u32 %s185, 4
          %s195 = int_to_ptr.vmem [resolvable:$true] %s194
          %197 = dma.hbm_to_vmem [thread:$0]  %s192, 128, %s195, %s182
        $region28: #{tpu_custom_call.1} parent=23 // pred_fallthru
          _
      $region24: #{tpu_custom_call.1} parent=5 // pred_fallthru
        _
      %p198 = scmp.le.s32.totalorder 1, %s12
      %p199 = scmp.lt.s32.totalorder %s12, 3
      %p200 = pnand %p198, %p199
      %p201 = pneg %p200
      // Predicated region
      $region29: #{tpu_custom_call.1} parent=5 // pred_check
        _
      $region30: #{tpu_custom_call.1} parent=5 // pred_check_branch
        %203 = sbr.rel (%p200) target = $region32
      $region31: #{tpu_custom_call.1} parent=5 // pred_region
        %s204 = ssub.s32 %s12, 1
        // Predicated region
        $region33: #{tpu_custom_call.1} parent=31 // pred_check
          %p205 = pneg %p50
        $region34: #{tpu_custom_call.1} parent=31 // pred_check_branch
          %207 = sbr.rel (%p205) target = $region36
        $region35: #{tpu_custom_call.1} parent=31 // pred_region
          %208 = dma.done [#allocation15], 512
        $region36: #{tpu_custom_call.1} parent=31 // pred_fallthru
          _
        // Predicated region
        $region37: #{tpu_custom_call.1} parent=31 // pred_check
          %p209 = pneg %p76
        $region38: #{tpu_custom_call.1} parent=31 // pred_check_branch
          %211 = sbr.rel (%p209) target = $region40
        $region39: #{tpu_custom_call.1} parent=31 // pred_region
          %212 = dma.done [#allocation18], 512
        $region40: #{tpu_custom_call.1} parent=31 // pred_fallthru
          _
        %s213 = sand.u32 %s17, 1
        %s214 = scalar_lea.sflag [#allocation15], %s213
        %s215 = sand.u32 %s93, 1
        %s216 = smul.addr %s215, 8
        %s217 = scalar_lea.vmem [#allocation19], %s216
        // Predicated region
        $region41: #{tpu_custom_call.1} parent=31 // pred_check
          %p218 = pneg %p106
        $region42: #{tpu_custom_call.1} parent=31 // pred_check_branch
          %220 = sbr.rel (%p218) target = $region44
        $region43: #{tpu_custom_call.1} parent=31 // pred_region
          %221 = dma.done %s214, 128
        $region44: #{tpu_custom_call.1} parent=31 // pred_fallthru
          _
        %p222 = pneg %p50
        %p223 = pneg %p47
        %p224 = pneg %p76
        %p225 = pneg %p73
        %s226 = sand.u32 %s17, 1
        %s227 = scalar_lea.sflag [#allocation15], %s226
        %s228 = sand.u32 %s93, 1
        %s229 = smul.addr %s228, 8
        %s230 = scalar_lea.vmem [#allocation19], %s229
        %p231 = pneg %p106
        %p232 = pneg %p103
        %p233 = pneg %p127
        %p234 = pneg %p124
        %s235 = smul.u32 4, %s22
        %s236 = smul.u32 4, %s22
        %s237 = ssub.s32 1, %s21
        %s238 = smul.u32 %s22, %s237
        %p239 = scmp.eq.s32.totalorder %s21, 0
        %p240 = scmp.eq.s32.totalorder %s22, 0
        %p241 = pnand %p239, %p240
        %p242 = pneg %p241
        // Predicated region
        $region45: #{tpu_custom_call.1} parent=31 // pred_check
          _
        $region46: #{tpu_custom_call.1} parent=31 // pred_check_branch
          %244 = sbr.rel (%p241) target = $region48
        $region47: #{tpu_custom_call.1} parent=31 // pred_region
          %245 = vst [vmem:[#allocation2] sm:$0xff] 0.0
          %246 = vst [vmem:[#allocation3] sm:$0xff] 0.0
          %247 = vst [vmem:[#allocation4] sm:$0xff] 0.0
          %248 = vst [vmem:[#allocation5] sm:$0xff] 0.0
          %249 = vst [vmem:[#allocation6] sm:$0xff] 0.0
          %vm250 = vcmask 0
          %251 = vst.msk [vmem:[#allocation9] sm:$0x1] %vm250, 0.0
          %252 = vst.msk [vmem:[#allocation10] sm:$0x1] %vm250, 0.0
          %253 = vst.msk [vmem:[#allocation11] sm:$0x1] %vm250, 0.0
        $region48: #{tpu_custom_call.1} parent=31 // pred_fallthru
          _
        // Predicated region
        $region49: #{tpu_custom_call.1} parent=31 // pred_check
          %p254 = pneg %p239
        $region50: #{tpu_custom_call.1} parent=31 // pred_check_branch
          %256 = sbr.rel (%p254) target = $region52
        $region51: #{tpu_custom_call.1} parent=31 // pred_region
          %v257 = vld [vmem:[%s217] sm:$0xff]
          %v258 = vunpack.c.0.s8 %v257
          %v259 = vunpack.c.1.s8 %v257
          %v260 = vunpack.c.2.s8 %v257
          %v261 = vunpack.c.3.s8 %v257
          %v262 = vcvt.s32.f32 %v258
          %v263 = vcvt.s32.f32 %v259
          %v264 = vcvt.s32.f32 %v260
          %v265 = vcvt.s32.f32 %v261
          %v266 = vld [vmem:[#allocation14] sm:$0xff]
          %v267 = vld [vmem:[#allocation14 + $0x8] sm:$0xff]
          %v268 = vld [vmem:[#allocation14 + $0x10] sm:$0xff]
          %v269 = vld [vmem:[#allocation14 + $0x18] sm:$0xff]
          %v270 = vmul.f32 %v262, %v266
          %v271 = vmul.f32 %v263, %v267
          %v272 = vmul.f32 %v264, %v268
          %v273 = vmul.f32 %v265, %v269
          %v274 = vmul.f32 %v270, %v266
          %v275 = vmul.f32 %v271, %v267
          %v276 = vmul.f32 %v272, %v268
          %v277 = vmul.f32 %v273, %v269
          %v278 = vadd.f32 %v274, %v275
          %v279 = vadd.f32 %v276, %v277
          %v280 = vadd.f32 %v278, %v279
          %v281 = vadd.f32 %v280, 0.0
          %v282 = vadd.f32 %v270, %v271
          %v283 = vadd.f32 %v272, %v273
          %v284 = vadd.f32 %v282, %v283
          %v285 = vadd.f32 %v284, 0.0
          %v286 = vadd.f32 %v262, %v263
          %v287 = vadd.f32 %v264, %v265
          %v288 = vadd.f32 %v286, %v287
          %v289 = vadd.f32 %v288, 0.0
          %v290 = vld [vmem:[#allocation17] sm:$0xff]
          %v291 = vld [vmem:[#allocation17 + $0x8] sm:$0xff]
          %v292 = vld [vmem:[#allocation17 + $0x10] sm:$0xff]
          %v293 = vld [vmem:[#allocation17 + $0x18] sm:$0xff]
          %v294 = vmul.f32 %v270, %v290
          %v295 = vmul.f32 %v271, %v291
          %v296 = vmul.f32 %v272, %v292
          %v297 = vmul.f32 %v273, %v293
          %v298 = vadd.f32 %v294, %v295
          %v299 = vadd.f32 %v296, %v297
          %v300 = vadd.f32 %v298, %v299
          %v301 = vadd.f32 %v300, 0.0
          %v302 = vmul.f32 %v262, %v290
          %v303 = vmul.f32 %v263, %v291
          %v304 = vmul.f32 %v264, %v292
          %v305 = vmul.f32 %v265, %v293
          %v306 = vadd.f32 %v302, %v303
          %v307 = vadd.f32 %v304, %v305
          %v308 = vadd.f32 %v306, %v307
          %v309 = vadd.f32 %v308, 0.0
          %v310 = vld [vmem:[#allocation2] sm:$0xff]
          %v311 = vadd.f32 %v310, %v281
          %312 = vst [vmem:[#allocation2] sm:$0xff] %v311
          %v313 = vld [vmem:[#allocation3] sm:$0xff]
          %v314 = vadd.f32 %v313, %v285
          %315 = vst [vmem:[#allocation3] sm:$0xff] %v314
          %v316 = vld [vmem:[#allocation4] sm:$0xff]
          %v317 = vadd.f32 %v316, %v289
          %318 = vst [vmem:[#allocation4] sm:$0xff] %v317
          %v319 = vld [vmem:[#allocation5] sm:$0xff]
          %v320 = vadd.f32 %v319, %v301
          %321 = vst [vmem:[#allocation5] sm:$0xff] %v320
          %v322 = vld [vmem:[#allocation6] sm:$0xff]
          %v323 = vadd.f32 %v322, %v309
          %324 = vst [vmem:[#allocation6] sm:$0xff] %v323
        $region52: #{tpu_custom_call.1} parent=31 // pred_fallthru
          _
        // Predicated region
        $region53: #{tpu_custom_call.1} parent=31 // pred_check
          _
        $region54: #{tpu_custom_call.1} parent=31 // pred_check_branch
          %326 = sbr.rel (%p241) target = $region56
        $region55: #{tpu_custom_call.1} parent=31 // pred_region
          %v327 = vld [vmem:[#allocation2] sm:$0xff]
          %328 = vadd.xlane.f32.xlu0 %v327
          %v329 = vpop.xlane.xlu0 %328
          %v330 = vrot.slane %v329, 4
          %v331 = vadd.f32 %v329, %v330
          %v332 = vrot.slane %v331, 2
          %v333 = vadd.f32 %v331, %v332
          %v334 = vrot.slane %v333, 1
          %v335 = vadd.f32 %v333, %v334
          %v336 = vld [vmem:[#allocation3] sm:$0xff]
          %337 = vadd.xlane.f32.xlu0 %v336
          %v338 = vpop.xlane.xlu0 %337
          %v339 = vrot.slane %v338, 4
          %v340 = vadd.f32 %v338, %v339
          %v341 = vrot.slane %v340, 2
          %v342 = vadd.f32 %v340, %v341
          %v343 = vrot.slane %v342, 1
          %v344 = vadd.f32 %v342, %v343
          %v345 = vld [vmem:[#allocation4] sm:$0xff]
          %346 = vadd.xlane.f32.xlu0 %v345
          %v347 = vpop.xlane.xlu0 %346
          %v348 = vrot.slane %v347, 4
          %v349 = vadd.f32 %v347, %v348
          %v350 = vrot.slane %v349, 2
          %v351 = vadd.f32 %v349, %v350
          %v352 = vrot.slane %v351, 1
          %v353 = vadd.f32 %v351, %v352
          %v354 = vld [vmem:[#allocation5] sm:$0xff]
          %355 = vadd.xlane.f32.xlu0 %v354
          %v356 = vpop.xlane.xlu0 %355
          %v357 = vrot.slane %v356, 4
          %v358 = vadd.f32 %v356, %v357
          %v359 = vrot.slane %v358, 2
          %v360 = vadd.f32 %v358, %v359
          %v361 = vrot.slane %v360, 1
          %v362 = vadd.f32 %v360, %v361
          %v363 = vld [vmem:[#allocation6] sm:$0xff]
          %364 = vadd.xlane.f32.xlu0 %v363
          %v365 = vpop.xlane.xlu0 %364
          %v366 = vrot.slane %v365, 4
          %v367 = vadd.f32 %v365, %v366
          %v368 = vrot.slane %v367, 2
          %v369 = vadd.f32 %v367, %v368
          %v370 = vrot.slane %v369, 1
          %v371 = vadd.f32 %v369, %v370
          %v372 = vmul.f32 %v335, %v353
          %v373 = vmul.f32 %v344, %v344
          %v374 = vsub.f32 %v372, %v373
          %vm375 = vcmp.gt.f32.partialorder %v374, 0.0
          %v376 = vsel %vm375, %v374, 1.0
          %v377 = vmul.f32 %v353, %v362
          %v378 = vmul.f32 %v344, %v371
          %v379 = vsub.f32 %v377, %v378
          %v380 = vrcp.pop %v376
          %v381 = vmul.f32 %v379, %v380
          %v382 = vsel %vm375, %v381, 0.0
          %vm383 = vcmask 0
          %384 = vst.msk [vmem:[#allocation7] sm:$0x1] %vm383, %v382
          %v385 = vsub.f32 0.0, %v344
          %v386 = vmul.f32 %v385, %v362
          %v387 = vmul.f32 %v335, %v371
          %v388 = vadd.f32 %v386, %v387
          %v389 = vmul.f32 %v388, %v380
          %v390 = vsel %vm375, %v389, 0.0
          %391 = vst.msk [vmem:[#allocation8] sm:$0x1] %vm383, %v390
        $region56: #{tpu_custom_call.1} parent=31 // pred_fallthru
          _
        %p392 = scmp.eq.s32.totalorder %s21, 1
        %p393 = pnand %p392, %p240
        %p394 = pneg %p393
        // Predicated region
        $region57: #{tpu_custom_call.1} parent=31 // pred_check
          _
        $region58: #{tpu_custom_call.1} parent=31 // pred_check_branch
          %396 = sbr.rel (%p393) target = $region60
        $region59: #{tpu_custom_call.1} parent=31 // pred_region
          %397 = vst [vmem:[#allocation12] sm:$0x1] 0.0
          %398 = vst [vmem:[#allocation13] sm:$0x1] 0.0
        $region60: #{tpu_custom_call.1} parent=31 // pred_fallthru
          _
        // Predicated region
        $region61: #{tpu_custom_call.1} parent=31 // pred_check
          %p399 = pneg %p392
        $region62: #{tpu_custom_call.1} parent=31 // pred_check_branch
          %401 = sbr.rel (%p399) target = $region64
        $region63: #{tpu_custom_call.1} parent=31 // pred_region
          %v402 = vld [vmem:[#allocation7] sm:$0x1]
          %v403 = vld [vmem:[#allocation8] sm:$0x1]
          %v404 = vlaneseq
          %v405 = vand.u32 %v404, 127
          %vm406 = vcmp.ge.s32.totalorder %v405, 1
          %vm407 = vcmp.lt.s32.totalorder %v405, 16
          %vm408 = vmand %vm406, %vm407
          %v409 = vlaneseq
          %v410 = vshrl.u32 %v409, 7
          %vm411 = vcmp.eq.s32.totalorder %v410, 0
          %s412 = smul.u32 %s22, 32
          %v413 = vld [vmem:[#allocation12] sm:$0x1]
          %v414 = vld [vmem:[#allocation13] sm:$0x1]
          %v415 = vld [vmem:[#allocation14] sm:$0xff]
          %v416 = vld [vmem:[#allocation17] sm:$0xff]
          %v418 = vlaneseq
          %v419 = vshrl.u32 %v418, 7
          %v420 = vsub.s32 0, %v419
          %v421 = vrot.slane %v402, %v420
          %422 = vset.pattern.permute.xlu0 0
          %423 = vperm.xlu0 %422, %v421
          %v424 = vpop.permute.xlu0 %423
          %v426 = vmul.f32 %v424, %v415
          %v428 = vlaneseq
          %v429 = vshrl.u32 %v428, 7
          %v430 = vsub.s32 0, %v429
          %v431 = vrot.slane %v403, %v430
          %432 = vset.pattern.permute.xlu0 0
          %433 = vperm.xlu0 %432, %v431
          %v434 = vpop.permute.xlu0 %433
          %v436 = vadd.f32 %v426, %v434
          %v437 = vstv %s412
          %v438 = vadd.s32 %v410, %v437
          %vm439 = vcmp.lt.s32.totalorder %v438, 16
          %vm440 = vcmp.ge.s32.totalorder %v438, 1
          %vm441 = vmand %vm440, %vm439
          %v442 = vsub.f32 %v436, %v416
          %v443 = vand.u32 2147483647, %v442
          %v444 = vsel %vm407, %v443, 0.0
          %v445 = vsel %vm439, 1, 0
          %vm446 = vcmp.eq.s32.totalorder %v445, 1
          %v447 = vsel %vm446, %v444, 0.0
          %v448 = vadd.f32 %v447, 0.0
          %449 = vrot.lane.b32.xlu0 %v416, 1
          %v450 = vpop.permute.xlu0 %449
          %v451 = vrot.slane %v416, 7
          %v453 = vlaneseq
          %v454 = vshrl.u32 %v453, 7
          %v455 = vsub.s32 0, %v454
          %v456 = vrot.slane %v413, %v455
          %v458 = vsel %vm411, %v456, %v451
          %v459 = vsub.f32 %v416, %v450
          %v460 = vsub.f32 %v416, %v458
          %v461 = vmul.f32 %v459, %v459
          %v462 = vmul.f32 %v460, %v460
          %v463 = vadd.f32 %v461, %v462
          %v464 = vadd.f32 %v459, 1e-06
          %v465 = vrcp.pop %v464
          %v466 = vmul.f32 %v464, %v465
          %v467 = vsub.f32 2.0, %v466
          %v468 = vmul.f32 %v465, %v467
          %vm469 = vcmp.eq.f32.partialorder %v468, %v468
          %v470 = vsel %vm469, %v468, %v465
          %v471 = vmul.f32 %v460, %v470
          %v472 = vand.u32 2147483647, %v471
          %vm473 = vcmp.gt.f32.partialorder %v472, 2.4142137
          %vm474 = vcmp.gt.f32.partialorder %v472, 0.41421357
          %v475 = vadd.f32 %v472, 1.0
          %v476 = vsel %vm473, %v472, %v475
          %v477 = vrcp.pop %v476
          %v478 = vmul.f32 %v476, %v477
          %v479 = vsub.f32 2.0, %v478
          %v480 = vmul.f32 %v477, %v479
          %vm481 = vcmp.eq.f32.partialorder %v480, %v480
          %v482 = vsel %vm481, %v480, %v477
          %v483 = vsub.f32 0.0, %v482
          %v484 = vsub.f32 %v472, 1.0
          %v485 = vmul.f32 %v484, %v482
          %v486 = vsel %vm474, %v485, %v472
          %v487 = vsel %vm473, %v483, %v486
          %v488 = vsel %vm474, 0.7853982, 0.0
          %v489 = vsel %vm473, 1.5707964, %v488
          %v490 = vmul.f32 %v487, %v487
          %v491 = vmul.f32 %v490, 0.080537446
          %v492 = vsub.f32 %v491, 0.13877685
          %v493 = vmul.f32 %v492, %v490
          %v494 = vadd.f32 %v493, 0.19977711
          %v495 = vmul.f32 %v494, %v490
          %v496 = vsub.f32 %v495, 0.3333295
          %v497 = vmul.f32 %v496, %v490
          %v498 = vmul.f32 %v497, %v487
          %v499 = vadd.f32 %v498, %v487
          %v500 = vadd.f32 %v489, %v499
          %v502 = vand.u32 %v471, 2147483648
          %v504 = vxor.u32 %v500, %v502
          %506 = vrot.lane.b32.xlu0 %v436, 1
          %v507 = vpop.permute.xlu0 %506
          %v508 = vrot.slane %v436, 7
          %v510 = vlaneseq
          %v511 = vshrl.u32 %v510, 7
          %v512 = vsub.s32 0, %v511
          %v513 = vrot.slane %v414, %v512
          %v515 = vsel %vm411, %v513, %v508
          %v516 = vsub.f32 %v436, %v507
          %v517 = vsub.f32 %v436, %v515
          %v518 = vmul.f32 %v516, %v516
          %v519 = vmul.f32 %v517, %v517
          %v520 = vadd.f32 %v518, %v519
          %v521 = vadd.f32 %v516, 1e-06
          %v522 = vrcp.pop %v521
          %v523 = vmul.f32 %v521, %v522
          %v524 = vsub.f32 2.0, %v523
          %v525 = vmul.f32 %v522, %v524
          %vm526 = vcmp.eq.f32.partialorder %v525, %v525
          %v527 = vsel %vm526, %v525, %v522
          %v528 = vmul.f32 %v517, %v527
          %v529 = vand.u32 2147483647, %v528
          %vm530 = vcmp.gt.f32.partialorder %v529, 2.4142137
          %vm531 = vcmp.gt.f32.partialorder %v529, 0.41421357
          %v532 = vadd.f32 %v529, 1.0
          %v533 = vsel %vm530, %v529, %v532
          %v534 = vrcp.pop %v533
          %v535 = vmul.f32 %v533, %v534
          %v536 = vsub.f32 2.0, %v535
          %v537 = vmul.f32 %v534, %v536
          %vm538 = vcmp.eq.f32.partialorder %v537, %v537
          %v539 = vsel %vm538, %v537, %v534
          %v540 = vsub.f32 0.0, %v539
          %v541 = vsub.f32 %v529, 1.0
          %v542 = vmul.f32 %v541, %v539
          %v543 = vsel %vm531, %v542, %v529
          %v544 = vsel %vm530, %v540, %v543
          %v545 = vsel %vm531, 0.7853982, 0.0
          %v546 = vsel %vm530, 1.5707964, %v545
          %v547 = vmul.f32 %v544, %v544
          %v548 = vmul.f32 %v547, 0.080537446
          %v549 = vsub.f32 %v548, 0.13877685
          %v550 = vmul.f32 %v549, %v547
          %v551 = vadd.f32 %v550, 0.19977711
          %v552 = vmul.f32 %v551, %v547
          %v553 = vsub.f32 %v552, 0.3333295
          %v554 = vmul.f32 %v553, %v547
          %v555 = vmul.f32 %v554, %v544
          %v556 = vadd.f32 %v555, %v544
          %v557 = vadd.f32 %v546, %v556
          %v559 = vand.u32 %v528, 2147483648
          %v561 = vxor.u32 %v557, %v559
          %v563 = vsel %vm441, 1, 0
          %vm564 = vcmp.eq.s32.totalorder %v563, 1
          %vm565 = vmand %vm564, %vm408
          %v566 = vsub.f32 %v520, %v463
          %v567 = vand.u32 2147483647, %v566
          %v568 = vsel %vm565, %v567, 0.0
          %v569 = vadd.f32 %v568, 0.0
          %v570 = vsub.f32 %v561, %v504
          %v571 = vand.u32 2147483647, %v570
          %v572 = vsel %vm565, %v571, 0.0
          %v573 = vadd.f32 %v572, 0.0
          %v574 = vld [vmem:[#allocation14 + $0x8] sm:$0xff]
          %v575 = vld [vmem:[#allocation17 + $0x8] sm:$0xff]
          %v576 = vmul.f32 %v424, %v574
          %v577 = vadd.f32 %v576, %v434
          %s578 = sadd.s32 %s412, 8
          %v579 = vstv %s578
          %v580 = vadd.s32 %v410, %v579
          %vm581 = vcmp.lt.s32.totalorder %v580, 16
          %vm582 = vcmp.ge.s32.totalorder %v580, 1
          %vm583 = vmand %vm582, %vm581
          %v584 = vsub.f32 %v577, %v575
          %v585 = vand.u32 2147483647, %v584
          %v586 = vsel %vm407, %v585, 0.0
          %v587 = vsel %vm581, 1, 0
          %vm588 = vcmp.eq.s32.totalorder %v587, 1
          %v589 = vsel %vm588, %v586, 0.0
          %v590 = vadd.f32 %v448, %v589
          %591 = vrot.lane.b32.xlu0 %v575, 1
          %v592 = vpop.permute.xlu0 %591
          %v593 = vrot.slane %v575, 7
          %v594 = vlaneseq
          %v595 = vshrl.u32 %v594, 7
          %v596 = vsub.s32 7, %v595
          %v597 = vrot.slane %v416, %v596
          %v598 = vsel %vm411, %v597, %v593
          %v599 = vsub.f32 %v575, %v592
          %v600 = vsub.f32 %v575, %v598
          %v601 = vmul.f32 %v599, %v599
          %v602 = vmul.f32 %v600, %v600
          %v603 = vadd.f32 %v601, %v602
          %v604 = vadd.f32 %v599, 1e-06
          %v605 = vrcp.pop %v604
          %v606 = vmul.f32 %v604, %v605
          %v607 = vsub.f32 2.0, %v606
          %v608 = vmul.f32 %v605, %v607
          %vm609 = vcmp.eq.f32.partialorder %v608, %v608
          %v610 = vsel %vm609, %v608, %v605
          %v611 = vmul.f32 %v600, %v610
          %v612 = vand.u32 2147483647, %v611
          %vm613 = vcmp.gt.f32.partialorder %v612, 2.4142137
          %vm614 = vcmp.gt.f32.partialorder %v612, 0.41421357
          %v615 = vadd.f32 %v612, 1.0
          %v616 = vsel %vm613, %v612, %v615
          %v617 = vrcp.pop %v616
          %v618 = vmul.f32 %v616, %v617
          %v619 = vsub.f32 2.0, %v618
          %v620 = vmul.f32 %v617, %v619
          %vm621 = vcmp.eq.f32.partialorder %v620, %v620
          %v622 = vsel %vm621, %v620, %v617
          %v623 = vsub.f32 0.0, %v622
          %v624 = vsub.f32 %v612, 1.0
          %v625 = vmul.f32 %v624, %v622
          %v626 = vsel %vm614, %v625, %v612
          %v627 = vsel %vm613, %v623, %v626
          %v628 = vsel %vm614, 0.7853982, 0.0
          %v629 = vsel %vm613, 1.5707964, %v628
          %v630 = vmul.f32 %v627, %v627
          %v631 = vmul.f32 %v630, 0.080537446
          %v632 = vsub.f32 %v631, 0.13877685
          %v633 = vmul.f32 %v632, %v630
          %v634 = vadd.f32 %v633, 0.19977711
          %v635 = vmul.f32 %v634, %v630
          %v636 = vsub.f32 %v635, 0.3333295
          %v637 = vmul.f32 %v636, %v630
          %v638 = vmul.f32 %v637, %v627
          %v639 = vadd.f32 %v638, %v627
          %v640 = vadd.f32 %v629, %v639
          %v642 = vand.u32 %v611, 2147483648
          %v644 = vxor.u32 %v640, %v642
          %646 = vrot.lane.b32.xlu0 %v577, 1
          %v647 = vpop.permute.xlu0 %646
          %v648 = vrot.slane %v577, 7
          %v649 = vlaneseq
          %v650 = vshrl.u32 %v649, 7
          %v651 = vsub.s32 7, %v650
          %v652 = vrot.slane %v436, %v651
          %v653 = vsel %vm411, %v652, %v648
          %v654 = vsub.f32 %v577, %v647
          %v655 = vsub.f32 %v577, %v653
          %v656 = vmul.f32 %v654, %v654
          %v657 = vmul.f32 %v655, %v655
          %v658 = vadd.f32 %v656, %v657
          %v659 = vadd.f32 %v654, 1e-06
          %v660 = vrcp.pop %v659
          %v661 = vmul.f32 %v659, %v660
          %v662 = vsub.f32 2.0, %v661
          %v663 = vmul.f32 %v660, %v662
          %vm664 = vcmp.eq.f32.partialorder %v663, %v663
          %v665 = vsel %vm664, %v663, %v660
          %v666 = vmul.f32 %v655, %v665
          %v667 = vand.u32 2147483647, %v666
          %vm668 = vcmp.gt.f32.partialorder %v667, 2.4142137
          %vm669 = vcmp.gt.f32.partialorder %v667, 0.41421357
          %v670 = vadd.f32 %v667, 1.0
          %v671 = vsel %vm668, %v667, %v670
          %v672 = vrcp.pop %v671
          %v673 = vmul.f32 %v671, %v672
          %v674 = vsub.f32 2.0, %v673
          %v675 = vmul.f32 %v672, %v674
          %vm676 = vcmp.eq.f32.partialorder %v675, %v675
          %v677 = vsel %vm676, %v675, %v672
          %v678 = vsub.f32 0.0, %v677
          %v679 = vsub.f32 %v667, 1.0
          %v680 = vmul.f32 %v679, %v677
          %v681 = vsel %vm669, %v680, %v667
          %v682 = vsel %vm668, %v678, %v681
          %v683 = vsel %vm669, 0.7853982, 0.0
          %v684 = vsel %vm668, 1.5707964, %v683
          %v685 = vmul.f32 %v682, %v682
          %v686 = vmul.f32 %v685, 0.080537446
          %v687 = vsub.f32 %v686, 0.13877685
          %v688 = vmul.f32 %v687, %v685
          %v689 = vadd.f32 %v688, 0.19977711
          %v690 = vmul.f32 %v689, %v685
          %v691 = vsub.f32 %v690, 0.3333295
          %v692 = vmul.f32 %v691, %v685
          %v693 = vmul.f32 %v692, %v682
          %v694 = vadd.f32 %v693, %v682
          %v695 = vadd.f32 %v684, %v694
          %v697 = vand.u32 %v666, 2147483648
          %v699 = vxor.u32 %v695, %v697
          %v701 = vsel %vm583, 1, 0
          %vm702 = vcmp.eq.s32.totalorder %v701, 1
          %vm703 = vmand %vm702, %vm408
          %v704 = vsub.f32 %v658, %v603
          %v705 = vand.u32 2147483647, %v704
          %v706 = vsel %vm703, %v705, 0.0
          %v707 = vadd.f32 %v569, %v706
          %v708 = vsub.f32 %v699, %v644
          %v709 = vand.u32 2147483647, %v708
          %v710 = vsel %vm703, %v709, 0.0
          %v711 = vadd.f32 %v573, %v710
          %v712 = vld [vmem:[#allocation14 + $0x10] sm:$0xff]
          %v713 = vld [vmem:[#allocation17 + $0x10] sm:$0xff]
          %v714 = vmul.f32 %v424, %v712
          %v715 = vadd.f32 %v714, %v434
          %s716 = sadd.s32 %s412, 16
          %v717 = vstv %s716
          %v718 = vadd.s32 %v410, %v717
          %vm719 = vcmp.lt.s32.totalorder %v718, 16
          %vm720 = vcmp.ge.s32.totalorder %v718, 1
          %vm721 = vmand %vm720, %vm719
          %v722 = vsub.f32 %v715, %v713
          %v723 = vand.u32 2147483647, %v722
          %v724 = vsel %vm407, %v723, 0.0
          %v725 = vsel %vm719, 1, 0
          %vm726 = vcmp.eq.s32.totalorder %v725, 1
          %v727 = vsel %vm726, %v724, 0.0
          %v728 = vadd.f32 %v590, %v727
          %729 = vrot.lane.b32.xlu0 %v713, 1
          %v730 = vpop.permute.xlu0 %729
          %v731 = vrot.slane %v713, 7
          %v732 = vlaneseq
          %v733 = vshrl.u32 %v732, 7
          %v734 = vsub.s32 7, %v733
          %v735 = vrot.slane %v575, %v734
          %v736 = vsel %vm411, %v735, %v731
          %v737 = vsub.f32 %v713, %v730
          %v738 = vsub.f32 %v713, %v736
          %v739 = vmul.f32 %v737, %v737
          %v740 = vmul.f32 %v738, %v738
          %v741 = vadd.f32 %v739, %v740
          %v742 = vadd.f32 %v737, 1e-06
          %v743 = vrcp.pop %v742
          %v744 = vmul.f32 %v742, %v743
          %v745 = vsub.f32 2.0, %v744
          %v746 = vmul.f32 %v743, %v745
          %vm747 = vcmp.eq.f32.partialorder %v746, %v746
          %v748 = vsel %vm747, %v746, %v743
          %v749 = vmul.f32 %v738, %v748
          %v750 = vand.u32 2147483647, %v749
          %vm751 = vcmp.gt.f32.partialorder %v750, 2.4142137
          %vm752 = vcmp.gt.f32.partialorder %v750, 0.41421357
          %v753 = vadd.f32 %v750, 1.0
          %v754 = vsel %vm751, %v750, %v753
          %v755 = vrcp.pop %v754
          %v756 = vmul.f32 %v754, %v755
          %v757 = vsub.f32 2.0, %v756
          %v758 = vmul.f32 %v755, %v757
          %vm759 = vcmp.eq.f32.partialorder %v758, %v758
          %v760 = vsel %vm759, %v758, %v755
          %v761 = vsub.f32 0.0, %v760
          %v762 = vsub.f32 %v750, 1.0
          %v763 = vmul.f32 %v762, %v760
          %v764 = vsel %vm752, %v763, %v750
          %v765 = vsel %vm751, %v761, %v764
          %v766 = vsel %vm752, 0.7853982, 0.0
          %v767 = vsel %vm751, 1.5707964, %v766
          %v768 = vmul.f32 %v765, %v765
          %v769 = vmul.f32 %v768, 0.080537446
          %v770 = vsub.f32 %v769, 0.13877685
          %v771 = vmul.f32 %v770, %v768
          %v772 = vadd.f32 %v771, 0.19977711
          %v773 = vmul.f32 %v772, %v768
          %v774 = vsub.f32 %v773, 0.3333295
          %v775 = vmul.f32 %v774, %v768
          %v776 = vmul.f32 %v775, %v765
          %v777 = vadd.f32 %v776, %v765
          %v778 = vadd.f32 %v767, %v777
          %v780 = vand.u32 %v749, 2147483648
          %v782 = vxor.u32 %v778, %v780
          %784 = vrot.lane.b32.xlu0 %v715, 1
          %v785 = vpop.permute.xlu0 %784
          %v786 = vrot.slane %v715, 7
          %v787 = vlaneseq
          %v788 = vshrl.u32 %v787, 7
          %v789 = vsub.s32 7, %v788
          %v790 = vrot.slane %v577, %v789
          %v791 = vsel %vm411, %v790, %v786
          %v792 = vsub.f32 %v715, %v785
          %v793 = vsub.f32 %v715, %v791
          %v794 = vmul.f32 %v792, %v792
          %v795 = vmul.f32 %v793, %v793
          %v796 = vadd.f32 %v794, %v795
          %v797 = vadd.f32 %v792, 1e-06
          %v798 = vrcp.pop %v797
          %v799 = vmul.f32 %v797, %v798
          %v800 = vsub.f32 2.0, %v799
          %v801 = vmul.f32 %v798, %v800
          %vm802 = vcmp.eq.f32.partialorder %v801, %v801
          %v803 = vsel %vm802, %v801, %v798
          %v804 = vmul.f32 %v793, %v803
          %v805 = vand.u32 2147483647, %v804
          %vm806 = vcmp.gt.f32.partialorder %v805, 2.4142137
          %vm807 = vcmp.gt.f32.partialorder %v805, 0.41421357
          %v808 = vadd.f32 %v805, 1.0
          %v809 = vsel %vm806, %v805, %v808
          %v810 = vrcp.pop %v809
          %v811 = vmul.f32 %v809, %v810
          %v812 = vsub.f32 2.0, %v811
          %v813 = vmul.f32 %v810, %v812
          %vm814 = vcmp.eq.f32.partialorder %v813, %v813
          %v815 = vsel %vm814, %v813, %v810
          %v816 = vsub.f32 0.0, %v815
          %v817 = vsub.f32 %v805, 1.0
          %v818 = vmul.f32 %v817, %v815
          %v819 = vsel %vm807, %v818, %v805
          %v820 = vsel %vm806, %v816, %v819
          %v821 = vsel %vm807, 0.7853982, 0.0
          %v822 = vsel %vm806, 1.5707964, %v821
          %v823 = vmul.f32 %v820, %v820
          %v824 = vmul.f32 %v823, 0.080537446
          %v825 = vsub.f32 %v824, 0.13877685
          %v826 = vmul.f32 %v825, %v823
          %v827 = vadd.f32 %v826, 0.19977711
          %v828 = vmul.f32 %v827, %v823
          %v829 = vsub.f32 %v828, 0.3333295
          %v830 = vmul.f32 %v829, %v823
          %v831 = vmul.f32 %v830, %v820
          %v832 = vadd.f32 %v831, %v820
          %v833 = vadd.f32 %v822, %v832
          %v835 = vand.u32 %v804, 2147483648
          %v837 = vxor.u32 %v833, %v835
          %v839 = vsel %vm721, 1, 0
          %vm840 = vcmp.eq.s32.totalorder %v839, 1
          %vm841 = vmand %vm840, %vm408
          %v842 = vsub.f32 %v796, %v741
          %v843 = vand.u32 2147483647, %v842
          %v844 = vsel %vm841, %v843, 0.0
          %v845 = vadd.f32 %v707, %v844
          %v846 = vsub.f32 %v837, %v782
          %v847 = vand.u32 2147483647, %v846
          %v848 = vsel %vm841, %v847, 0.0
          %v849 = vadd.f32 %v711, %v848
          %v850 = vld [vmem:[#allocation14 + $0x18] sm:$0xff]
          %v851 = vld [vmem:[#allocation17 + $0x18] sm:$0xff]
          %v852 = vmul.f32 %v424, %v850
          %v853 = vadd.f32 %v852, %v434
          %s854 = sadd.s32 %s412, 24
          %v855 = vstv %s854
          %v856 = vadd.s32 %v410, %v855
          %vm857 = vcmp.lt.s32.totalorder %v856, 16
          %vm858 = vcmp.ge.s32.totalorder %v856, 1
          %vm859 = vmand %vm858, %vm857
          %v860 = vsub.f32 %v853, %v851
          %v861 = vand.u32 2147483647, %v860
          %v862 = vsel %vm407, %v861, 0.0
          %v863 = vsel %vm857, 1, 0
          %vm864 = vcmp.eq.s32.totalorder %v863, 1
          %v865 = vsel %vm864, %v862, 0.0
          %v866 = vadd.f32 %v728, %v865
          %867 = vrot.lane.b32.xlu0 %v851, 1
          %v868 = vpop.permute.xlu0 %867
          %v869 = vrot.slane %v851, 7
          %v870 = vlaneseq
          %v871 = vshrl.u32 %v870, 7
          %v872 = vsub.s32 7, %v871
          %v873 = vrot.slane %v713, %v872
          %v874 = vsel %vm411, %v873, %v869
          %v875 = vsub.f32 %v851, %v868
          %v876 = vsub.f32 %v851, %v874
          %v877 = vmul.f32 %v875, %v875
          %v878 = vmul.f32 %v876, %v876
          %v879 = vadd.f32 %v877, %v878
          %v880 = vadd.f32 %v875, 1e-06
          %v881 = vrcp.pop %v880
          %v882 = vmul.f32 %v880, %v881
          %v883 = vsub.f32 2.0, %v882
          %v884 = vmul.f32 %v881, %v883
          %vm885 = vcmp.eq.f32.partialorder %v884, %v884
          %v886 = vsel %vm885, %v884, %v881
          %v887 = vmul.f32 %v876, %v886
          %v888 = vand.u32 2147483647, %v887
          %vm889 = vcmp.gt.f32.partialorder %v888, 2.4142137
          %vm890 = vcmp.gt.f32.partialorder %v888, 0.41421357
          %v891 = vadd.f32 %v888, 1.0
          %v892 = vsel %vm889, %v888, %v891
          %v893 = vrcp.pop %v892
          %v894 = vmul.f32 %v892, %v893
          %v895 = vsub.f32 2.0, %v894
          %v896 = vmul.f32 %v893, %v895
          %vm897 = vcmp.eq.f32.partialorder %v896, %v896
          %v898 = vsel %vm897, %v896, %v893
          %v899 = vsub.f32 0.0, %v898
          %v900 = vsub.f32 %v888, 1.0
          %v901 = vmul.f32 %v900, %v898
          %v902 = vsel %vm890, %v901, %v888
          %v903 = vsel %vm889, %v899, %v902
          %v904 = vsel %vm890, 0.7853982, 0.0
          %v905 = vsel %vm889, 1.5707964, %v904
          %v906 = vmul.f32 %v903, %v903
          %v907 = vmul.f32 %v906, 0.080537446
          %v908 = vsub.f32 %v907, 0.13877685
          %v909 = vmul.f32 %v908, %v906
          %v910 = vadd.f32 %v909, 0.19977711
          %v911 = vmul.f32 %v910, %v906
          %v912 = vsub.f32 %v911, 0.3333295
          %v913 = vmul.f32 %v912, %v906
          %v914 = vmul.f32 %v913, %v903
          %v915 = vadd.f32 %v914, %v903
          %v916 = vadd.f32 %v905, %v915
          %v918 = vand.u32 %v887, 2147483648
          %v920 = vxor.u32 %v916, %v918
          %922 = vrot.lane.b32.xlu0 %v853, 1
          %v923 = vpop.permute.xlu0 %922
          %v924 = vrot.slane %v853, 7
          %v925 = vlaneseq
          %v926 = vshrl.u32 %v925, 7
          %v927 = vsub.s32 7, %v926
          %v928 = vrot.slane %v715, %v927
          %v929 = vsel %vm411, %v928, %v924
          %v930 = vsub.f32 %v853, %v923
          %v931 = vsub.f32 %v853, %v929
          %v932 = vmul.f32 %v930, %v930
          %v933 = vmul.f32 %v931, %v931
          %v934 = vadd.f32 %v932, %v933
          %v935 = vadd.f32 %v930, 1e-06
          %v936 = vrcp.pop %v935
          %v937 = vmul.f32 %v935, %v936
          %v938 = vsub.f32 2.0, %v937
          %v939 = vmul.f32 %v936, %v938
          %vm940 = vcmp.eq.f32.partialorder %v939, %v939
          %v941 = vsel %vm940, %v939, %v936
          %v942 = vmul.f32 %v931, %v941
          %v943 = vand.u32 2147483647, %v942
          %vm944 = vcmp.gt.f32.partialorder %v943, 2.4142137
          %vm945 = vcmp.gt.f32.partialorder %v943, 0.41421357
          %v946 = vadd.f32 %v943, 1.0
          %v947 = vsel %vm944, %v943, %v946
          %v948 = vrcp.pop %v947
          %v949 = vmul.f32 %v947, %v948
          %v950 = vsub.f32 2.0, %v949
          %v951 = vmul.f32 %v948, %v950
          %vm952 = vcmp.eq.f32.partialorder %v951, %v951
          %v953 = vsel %vm952, %v951, %v948
          %v954 = vsub.f32 0.0, %v953
          %v955 = vsub.f32 %v943, 1.0
          %v956 = vmul.f32 %v955, %v953
          %v957 = vsel %vm945, %v956, %v943
          %v958 = vsel %vm944, %v954, %v957
          %v959 = vsel %vm945, 0.7853982, 0.0
          %v960 = vsel %vm944, 1.5707964, %v959
          %v961 = vmul.f32 %v958, %v958
          %v962 = vmul.f32 %v961, 0.080537446
          %v963 = vsub.f32 %v962, 0.13877685
          %v964 = vmul.f32 %v963, %v961
          %v965 = vadd.f32 %v964, 0.19977711
          %v966 = vmul.f32 %v965, %v961
          %v967 = vsub.f32 %v966, 0.3333295
          %v968 = vmul.f32 %v967, %v961
          %v969 = vmul.f32 %v968, %v958
          %v970 = vadd.f32 %v969, %v958
          %v971 = vadd.f32 %v960, %v970
          %v973 = vand.u32 %v942, 2147483648
          %v975 = vxor.u32 %v971, %v973
          %v977 = vsel %vm859, 1, 0
          %vm978 = vcmp.eq.s32.totalorder %v977, 1
          %vm979 = vmand %vm978, %vm408
          %v980 = vsub.f32 %v934, %v879
          %v981 = vand.u32 2147483647, %v980
          %v982 = vsel %vm979, %v981, 0.0
          %v983 = vadd.f32 %v845, %v982
          %v984 = vsub.f32 %v975, %v920
          %v985 = vand.u32 2147483647, %v984
          %v986 = vsel %vm979, %v985, 0.0
          %v987 = vadd.f32 %v849, %v986
          %988 = vst [vmem:[#allocation12 - $0x7] sm:$0x80] %v851
          %989 = vst [vmem:[#allocation13 - $0x7] sm:$0x80] %v853
          %v990 = vld [vmem:[#allocation9] sm:$0x1]
          %991 = vadd.xlane.f32.xlu0 %v866
          %v992 = vpop.xlane.xlu0 %991
          %v993 = vrot.slane %v992, 4
          %v994 = vadd.f32 %v992, %v993
          %v995 = vrot.slane %v994, 2
          %v996 = vadd.f32 %v994, %v995
          %v997 = vrot.slane %v996, 1
          %v998 = vadd.f32 %v996, %v997
          %v999 = vadd.f32 %v990, %v998
          %vm1000 = vcmask 0
          %1001 = vst.msk [vmem:[#allocation9] sm:$0x1] %vm1000, %v999
          %v1002 = vld [vmem:[#allocation10] sm:$0x1]
          %1003 = vadd.xlane.f32.xlu0 %v983
          %v1004 = vpop.xlane.xlu0 %1003
          %v1005 = vrot.slane %v1004, 4
          %v1006 = vadd.f32 %v1004, %v1005
          %v1007 = vrot.slane %v1006, 2
          %v1008 = vadd.f32 %v1006, %v1007
          %v1009 = vrot.slane %v1008, 1
          %v1010 = vadd.f32 %v1008, %v1009
          %v1011 = vadd.f32 %v1002, %v1010
          %1012 = vst.msk [vmem:[#allocation10] sm:$0x1] %vm1000, %v1011
          %v1013 = vld [vmem:[#allocation11] sm:$0x1]
          %1014 = vadd.xlane.f32.xlu0 %v987
          %v1015 = vpop.xlane.xlu0 %1014
          %v1016 = vrot.slane %v1015, 4
          %v1017 = vadd.f32 %v1015, %v1016
          %v1018 = vrot.slane %v1017, 2
          %v1019 = vadd.f32 %v1017, %v1018
          %v1020 = vrot.slane %v1019, 1
          %v1021 = vadd.f32 %v1019, %v1020
          %v1022 = vadd.f32 %v1013, %v1021
          %1023 = vst.msk [vmem:[#allocation11] sm:$0x1] %vm1000, %v1022
        $region64: #{tpu_custom_call.1} parent=31 // pred_fallthru
          _
        // Predicated region
        $region65: #{tpu_custom_call.1} parent=31 // pred_check
          _
        $region66: #{tpu_custom_call.1} parent=31 // pred_check_branch
          %1025 = sbr.rel (%p393) target = $region68
        $region67: #{tpu_custom_call.1} parent=31 // pred_region
          %v1026 = vld [vmem:[#allocation9] sm:$0x1]
          %v1027 = vmul.f32 %v1026, 0.00390625
          %v1028 = vld [vmem:[#allocation10] sm:$0x1]
          %v1029 = vld [vmem:[#allocation11] sm:$0x1]
          %v1030 = vadd.f32 %v1028, %v1029
          %v1031 = vmul.f32 %v1030, 0.0044444446
          %v1032 = vadd.f32 %v1027, %v1031
          %vm1033 = vcmask 0
          %1034 = vst.msk [vmem:[#allocation20] sm:$0x1] %vm1033, %v1032
        $region68: #{tpu_custom_call.1} parent=31 // pred_fallthru
          _
        // Predicated region
        $region69: #{tpu_custom_call.1} parent=31 // pred_check
          %p1035 = pneg %p124
        $region70: #{tpu_custom_call.1} parent=31 // pred_check_branch
          %1037 = sbr.rel (%p1035) target = $region72
        $region71: #{tpu_custom_call.1} parent=31 // pred_region
          %s1039 = ssub.s32 16, 16
          %1040 = vsyncadd [#allocation16], %s1039
          %s1042 = sshll.u32 [#allocation20], 4
          %s1043 = int_to_ptr.vmem [resolvable:$true] %s1042
          %1045 = dma.vmem_to_hbm [thread:$0]  %s1043, 16, %s3, [#allocation16]
        $region72: #{tpu_custom_call.1} parent=31 // pred_fallthru
          _
        // Predicated region
        $region73: #{tpu_custom_call.1} parent=31 // pred_check
          %p1046 = pneg %p124
        $region74: #{tpu_custom_call.1} parent=31 // pred_check_branch
          %1048 = sbr.rel (%p1046) target = $region76
        $region75: #{tpu_custom_call.1} parent=31 // pred_region
          %1049 = dma.done [#allocation16], 16
        $region76: #{tpu_custom_call.1} parent=31 // pred_fallthru
          _
      $region32: #{tpu_custom_call.1} parent=5 // pred_fallthru
        _
      %p1050 = scmp.le.s32.totalorder 2, %s12
      // Predicated region
      $region77: #{tpu_custom_call.1} parent=5 // pred_check
        %p1051 = pneg %p1050
      $region78: #{tpu_custom_call.1} parent=5 // pred_check_branch
        %1053 = sbr.rel (%p1051) target = $region80
      $region79: #{tpu_custom_call.1} parent=5 // pred_region
        %s1054 = ssub.s32 %s12, 2
      $region80: #{tpu_custom_call.1} parent=5 // pred_fallthru
        _
    $region6: #{tpu_custom_call.1} parent=1 // loop_footer
      %s16 = sadd.s32 1, %s12
    $region7: #{tpu_custom_call.1} parent=1 // loop_footer_branch
      %11 = sbr.rel target = $region3
    $region8: #{tpu_custom_call.1} parent=1 // loop_exit
      _
    %1055 = vsyncpa [#allocation15], 1
    %s1056 = scalar_lea.sflag [#allocation15], 1
    %1057 = vsyncpa %s1056, 1
    %1058 = vsyncpa [#allocation18], 1
    %1059 = vsyncpa [#allocation16], 1
    %s1060 = scalar_lea.sflag [#allocation16], 1
    %1061 = vsyncpa %s1060, 1

</llo_original>
